<compile_context>
chip_gen: v7x
topology: tpu7x:2x2x1
jax: 0.10.0
libtpu: 0.0.40
codegen_flags: <defaults>
</compile_context>

<pallas_src>
import functools

import jax
import jax.numpy as jnp
import numpy as np
from jax import lax
from jax.experimental import pallas as pl
from jax.experimental.pallas import tpu as pltpu
from jax.scipy.linalg import solve_triangular

SMALL_NUMBER = 0.001

# Raise v5e's 16 MiB scoped default, stay well under v7x's 64 MiB physical.
_VMEM_LIMIT_BYTES = 32 * 1024 * 1024
_VMEM_BUDGET_BYTES = 24 * 1024 * 1024
_MAX_TILE_ROWS = 1024


def _round_up(a, b):
    return ((a + b - 1) // b) * b


def _sublane_quantum(dtype):
    # f32 -> 8 rows, bf16 -> 16, int8/fp8 -> 32 (sub-32-bit packs along sublanes).
    return max(8, 32 // jnp.dtype(dtype).itemsize)


def _pack_factor(n, d):
    """Lane-packing factor g: reshape (N, D) -> (N/g, g*D) with g*D == 128."""
    if d <= 0 or d >= 128 or 128 % d != 0:
        return 1
    g = 128 // d
    if g <= 1 or n % g != 0:
        return 1
    return g


def _pick_tile_rows(n_rows, stream_bytes_per_row, resident_bytes, quantum):
    """Largest row tile (multiple of `quantum`) whose double-buffered working
    set fits the VMEM budget, clamped to what the problem actually needs."""
    avail = max(_VMEM_BUDGET_BYTES - resident_bytes, 0)
    by_budget = avail // max(stream_bytes_per_row, 1)
    tn = min(_MAX_TILE_ROWS, by_budget, _round_up(n_rows, quantum))
    tn = max(quantum, (tn // quantum) * quantum)
    return int(tn)


def _num_gram_splits(n_blocks):
    """Leading 'parallel' split only pays on v7x (2 TensorCores)."""
    try:
        kind = (jax.devices()[0].device_kind or "").lower()
    except Exception:
        kind = ""
    if "v7" in kind and n_blocks >= 8 and n_blocks % 2 == 0:
        return 2
    return 1


# ----------------------------------------------------------------------------
# Kernel 1: Gram  G_s = sum_k X_{s,k}^T X_{s,k}  (+ eps*I folded into split 0)
#   grid = (num_splits [parallel], tiles_per_split [arbitrary])
#   output block (s, :, :) is resident across the reduction axis (f32 acc).
# ----------------------------------------------------------------------------
def _gram_kernel(x_ref, g_ref, *, n_rows, tile_rows, tiles_per_split,
                 ragged, eps, d_orig):
    s = pl.program_id(0)
    k = pl.program_id(1)

    @pl.when(k == 0)
    def _():
        g_ref[...] = jnp.zeros_like(g_ref)

    x = x_ref[...]
    if ragged:
        # Mask garbage rows of the (only) ragged boundary block.
        gb = s * tiles_per_split + k
        rows = gb * tile_rows + lax.broadcasted_iota(jnp.int32, x.shape, 0)
        x = jnp.where(rows < n_rows, x, jnp.zeros_like(x))

    # X^T X without materializing a transpose: contract the sublane (row) axis
    # of x with itself on the MXU.
    g_ref[...] += lax.dot_general(
        x, x,
        dimension_numbers=(((0,), (0,)), ((), ())),
        preferred_element_type=jnp.float32,
    )

    # Fold eps*I into the last reduction step of split 0 only.  With lane
    # packing, only the first D x D diagonal block gets eps (r < d_orig), so
    # the wrapper's diagonal-block sum sees eps exactly once.
    @pl.when(jnp.logical_and(k == tiles_per_split - 1, s == 0))
    def _():
        dd = g_ref.shape[-1]
        r = lax.broadcasted_iota(jnp.int32, (dd, dd), 0)
        c = lax.broadcasted_iota(jnp.int32, (dd, dd), 1)
        mask = jnp.logical_and(r == c, r < d_orig)
        g_ref[...] += jnp.where(mask, jnp.float32(eps), jnp.float32(0.0))


def gram_plus_eps(x, eps):
    """Returns X^T X + eps * I as float32 (D, D)."""
    n, d = x.shape
    g = _pack_factor(n, d)
    xk = x.reshape(n // g, g * d) if g > 1 else x          # free row-major reshape
    rows, cols = xk.shape

    q = _sublane_quantum(x.dtype)
    xb = x.dtype.itemsize
    tile_rows = _pick_tile_rows(rows,
                                stream_bytes_per_row=2 * cols * xb,
                                resident_bytes=2 * cols * cols * 4,
                                quantum=q)
    n_blocks = pl.cdiv(rows, tile_rows)
    num_splits = _num_gram_splits(n_blocks)
    tiles_per_split = n_blocks // num_splits
    ragged = (n_blocks * tile_rows != rows)

    kernel = functools.partial(
        _gram_kernel, n_rows=rows, tile_rows=tile_rows,
        tiles_per_split=tiles_per_split, ragged=ragged,
        eps=float(eps), d_orig=d)

    partials = pl.pallas_call(
        kernel,
        out_shape=jax.ShapeDtypeStruct((num_splits, cols, cols), jnp.float32),
        grid_spec=pltpu.PrefetchScalarGridSpec(
            num_scalar_prefetch=0,
            grid=(num_splits, tiles_per_split),
            in_specs=[
                pl.BlockSpec((tile_rows, cols),
                             lambda s, k: (s * tiles_per_split + k, 0)),
            ],
            out_specs=pl.BlockSpec((None, cols, cols), lambda s, k: (s, 0, 0)),
        ),
        compiler_params=pltpu.CompilerParams(
            dimension_semantics=("parallel", "arbitrary"),
            vmem_limit_bytes=_VMEM_LIMIT_BYTES),
        cost_estimate=pl.CostEstimate(
            flops=2 * rows * cols * cols,
            transcendentals=0,
            bytes_accessed=rows * cols * xb + num_splits * cols * cols * 4),
    )(xk)

    gp = partials[0] if num_splits == 1 else partials.sum(axis=0)
    if g > 1:
        # Sum the g diagonal D x D blocks of the packed Gram -> X^T X.
        gp = jnp.einsum('iaib->ab', gp.reshape(g, d, g, d))
    return gp


# ----------------------------------------------------------------------------
# Kernel 2: out = X @ W.T   (tiled over row tiles of X; W block is resident)
#   With lane packing, W = kron(I_g, ort) so the packed product equals the
#   per-row `row @ ort.T` of the reference.
# ----------------------------------------------------------------------------
def _apply_kernel(x_ref, w_ref, o_ref):
    # x @ w.T via contracting dim 1 of both operands: no in-kernel transpose.
    o_ref[...] = lax.dot_general(
        x_ref[...], w_ref[...],
        dimension_numbers=(((1,), (1,)), ((), ())),
        preferred_element_type=jnp.float32,
    ).astype(o_ref.dtype)


def apply_ort(x, ort):
    n, d = x.shape
    g = _pack_factor(n, d)
    if g > 1:
        xk = x.reshape(n // g, g * d)                       # free row-major reshape
        w = jnp.kron(jnp.eye(g, dtype=ort.dtype), ort)      # block-diag, (128,128)
    else:
        xk, w = x, ort
    w = w.astype(x.dtype)
    rows, cols = xk.shape

    q = _sublane_quantum(x.dtype)
    xb = x.dtype.itemsize
    tile_rows = _pick_tile_rows(rows,
                                stream_bytes_per_row=4 * cols * xb,   # in + out, 2-buf
                                resident_bytes=2 * cols * cols * xb,
                                quantum=q)
    n_blocks = pl.cdiv(rows, tile_rows)

    out = pl.pallas_call(
        _apply_kernel,
        out_shape=jax.ShapeDtypeStruct((rows, cols), x.dtype),
        grid_spec=pltpu.PrefetchScalarGridSpec(
            num_scalar_prefetch=0,
            grid=(n_blocks,),
            in_specs=[
                pl.BlockSpec((tile_rows, cols), lambda i: (i, 0)),
                pl.BlockSpec((cols, cols), lambda i: (0, 0)),
            ],
            out_specs=pl.BlockSpec((tile_rows, cols), lambda i: (i, 0)),
        ),
        compiler_params=pltpu.CompilerParams(
            dimension_semantics=("parallel",),
            vmem_limit_bytes=_VMEM_LIMIT_BYTES),
        cost_estimate=pl.CostEstimate(
            flops=2 * rows * cols * cols,
            transcendentals=0,
            bytes_accessed=2 * rows * cols * xb + cols * cols * xb),
    )(xk, w)

    if g > 1:
        out = out.reshape(n, d)
    return out


# ----------------------------------------------------------------------------
# Module-level forward (mirrors Orthogonalization.forward), fully jitted.
# ----------------------------------------------------------------------------
class Orthogonalization:
    def __init__(self, input_size):
        assert len(input_size) == 1
        d = input_size[0]
        # deterministic init: identity buffer, as in the PyTorch __init__
        self.ort_weights = jnp.eye(d, dtype=jnp.float32)
        self.small_number = SMALL_NUMBER
        self.training = True

        eps = float(self.small_number)

        def _train(inp):
            dd = inp.shape[1]
            gram = gram_plus_eps(inp, eps)                     # Pallas kernel
            chol = jnp.linalg.cholesky(gram)                   # plain XLA
            # inv(chol) via triangular solve (same result, better conditioned)
            ort = solve_triangular(chol, jnp.eye(dd, dtype=gram.dtype),
                                   lower=True)                 # plain XLA
            out = apply_ort(inp, ort)                          # Pallas kernel
            return out, ort

        def _eval(inp, ort):
            return apply_ort(inp, ort)                         # Pallas kernel

        # One jit per mode: collapses dispatch overhead, lets XLA overlap the
        # tiny Cholesky/trisolve with the apply kernel's first X prefetch.
        self._train_fn = jax.jit(_train)
        self._eval_fn = jax.jit(_eval)

    def __call__(self, inp):
        if self.training:
            out, ort = self._train_fn(inp)
            self.ort_weights = ort                             # update buffer
        else:
            out = self._eval_fn(inp, self.ort_weights)
        return out


if __name__ == "__main__":
    key = jax.random.PRNGKey(0)
    N, D = 128, 16
    inp = jax.random.normal(key, (N, D), dtype=jnp.float32)

    mod = Orthogonalization((D,))

    # --- training-mode forward (hits the lane-packed path: g = 8) ---
    out_train = jax.block_until_ready(mod(inp))

    # reference (pure JAX semantics of the PyTorch module)
    g_ref = inp.T @ inp + SMALL_NUMBER * jnp.eye(D, dtype=jnp.float32)
    ort_ref = jnp.linalg.inv(jnp.linalg.cholesky(g_ref))
    ref_train = inp @ ort_ref.T
    np.testing.assert_allclose(np.asarray(out_train), np.asarray(ref_train),
                               rtol=1e-4, atol=1e-4)

    # --- eval-mode forward (uses stored ort_weights) ---
    mod.training = False
    out_eval = jax.block_until_ready(mod(inp))
    ref_eval = inp @ mod.ort_weights.T
    np.testing.assert_allclose(np.asarray(out_eval), np.asarray(ref_eval),
                               rtol=1e-4, atol=1e-4)

    # --- ragged batch (exercises cdiv grid + in-kernel mask, unpacked path) ---
    key2 = jax.random.PRNGKey(1)
    N2 = 130
    inp2 = jax.random.normal(key2, (N2, D), dtype=jnp.float32)
    mod2 = Orthogonalization((D,))
    out2 = jax.block_until_ready(mod2(inp2))
    g2 = inp2.T @ inp2 + SMALL_NUMBER * jnp.eye(D, dtype=jnp.float32)
    ort2 = jnp.linalg.inv(jnp.linalg.cholesky(g2))
    ref2 = inp2 @ ort2.T
    np.testing.assert_allclose(np.asarray(out2), np.asarray(ref2),
                               rtol=1e-4, atol=1e-4)

    print("KERNEL_OK")
</pallas_src>

<mosaic_0001>
module attributes {stable_mosaic.version = 11 : i64} {
  func.func @_gram_kernel(%arg0: i32, %arg1: i32, %arg2: memref<16x128xf32, #tpu.memory_space<vmem>>, %arg3: memref<1x128x128xf32, #tpu.memory_space<vmem>>) attributes {dimension_semantics = [#tpu.dimension_semantics<parallel>, #tpu.dimension_semantics<arbitrary>], iteration_bounds = array<i64: 1, 1>, scalar_prefetch = 0 : i64, scratch_operands = 0 : i64, tpu.core_type = #tpu.core_type<tc>, window_params = [{transform_indices = @transform_0, window_bounds = array<i64: 16, 128>}, {transform_indices = @transform_1, window_bounds = array<i64: 1, 128, 128>}]} {
    %c0_i32 = arith.constant 0 : i32
    %0 = arith.cmpi eq, %arg1, %c0_i32 : i32
    %1 = arith.extui %0 : i1 to i32
    %c0_i32_0 = arith.constant 0 : i32
    %2 = arith.cmpi ne, %1, %c0_i32_0 : i32
    scf.if %2 {
      %cst_11 = arith.constant 0.000000e+00 : f32
      %16 = vector.broadcast %cst_11 : f32 to vector<128x128xf32>
      %c0_12 = arith.constant 0 : index
      %c0_13 = arith.constant 0 : index
      %c0_14 = arith.constant 0 : index
      %17 = vector.load %arg3[%c0_12, %c0_13, %c0_14] : memref<1x128x128xf32, #tpu.memory_space<vmem>>, vector<1x128x128xf32>
      %18 = vector.shape_cast %17 : vector<1x128x128xf32> to vector<128x128xf32>
      %19 = vector.shape_cast %16 : vector<128x128xf32> to vector<1x128x128xf32>
      tpu.vector_store %arg3[%c0_12, %c0_13, %c0_14], %19 {strides = array<i32>} : memref<1x128x128xf32, #tpu.memory_space<vmem>>, vector<1x128x128xf32>,
    } else {
    }
    %c0 = arith.constant 0 : index
    %c0_1 = arith.constant 0 : index
    %3 = vector.load %arg2[%c0, %c0_1] : memref<16x128xf32, #tpu.memory_space<vmem>>, vector<16x128xf32>
    %c0_2 = arith.constant 0 : index
    %c0_3 = arith.constant 0 : index
    %c0_4 = arith.constant 0 : index
    %4 = vector.load %arg3[%c0_2, %c0_3, %c0_4] : memref<1x128x128xf32, #tpu.memory_space<vmem>>, vector<1x128x128xf32>
    %5 = vector.shape_cast %4 : vector<1x128x128xf32> to vector<128x128xf32>
    %cst = arith.constant dense<0.000000e+00> : vector<128x128xf32>
    %6 = tpu.matmul %3, %3, %cst {dimension_numbers = #tpu.dot_dimension_numbers<[0], [0], [1], [1], [0, 1, 1, 1], [], []>} : vector<16x128xf32>, vector<16x128xf32>, vector<128x128xf32> -> vector<128x128xf32>
    %7 = arith.addf %5, %6 : vector<128x128xf32>
    %c0_5 = arith.constant 0 : index
    %c0_6 = arith.constant 0 : index
    %c0_7 = arith.constant 0 : index
    %8 = vector.load %arg3[%c0_5, %c0_6, %c0_7] : memref<1x128x128xf32, #tpu.memory_space<vmem>>, vector<1x128x128xf32>
    %9 = vector.shape_cast %8 : vector<1x128x128xf32> to vector<128x128xf32>
    %10 = vector.shape_cast %7 : vector<128x128xf32> to vector<1x128x128xf32>
    tpu.vector_store %arg3[%c0_5, %c0_6, %c0_7], %10 {strides = array<i32>} : memref<1x128x128xf32, #tpu.memory_space<vmem>>, vector<1x128x128xf32>,
    %c0_i32_8 = arith.constant 0 : i32
    %11 = arith.cmpi eq, %arg1, %c0_i32_8 : i32
    %c0_i32_9 = arith.constant 0 : i32
    %12 = arith.cmpi eq, %arg0, %c0_i32_9 : i32
    %13 = arith.andi %11, %12 : i1
    %14 = arith.extui %13 : i1 to i32
    %c0_i32_10 = arith.constant 0 : i32
    %15 = arith.cmpi ne, %14, %c0_i32_10 : i32
    scf.if %15 {
      %16 = tpu.iota {dimensions = array<i32: 0>} : vector<128x128xi32>
      %17 = tpu.iota {dimensions = array<i32: 1>} : vector<128x128xi32>
      %18 = arith.cmpi eq, %16, %17 : vector<128x128xi32>
      %c16_i32 = arith.constant 16 : i32
      %19 = vector.broadcast %c16_i32 : i32 to vector<128x128xi32>
      %20 = arith.cmpi slt, %16, %19 : vector<128x128xi32>
      %21 = arith.andi %18, %20 : vector<128x128xi1>
      %c0_11 = arith.constant 0 : index
      %c0_12 = arith.constant 0 : index
      %c0_13 = arith.constant 0 : index
      %22 = vector.load %arg3[%c0_11, %c0_12, %c0_13] : memref<1x128x128xf32, #tpu.memory_space<vmem>>, vector<1x128x128xf32>
      %23 = vector.shape_cast %22 : vector<1x128x128xf32> to vector<128x128xf32>
      %cst_14 = arith.constant 1.000000e-03 : f32
      %cst_15 = arith.constant 0.000000e+00 : f32
      %24 = vector.broadcast %cst_14 : f32 to vector<128x128xf32>
      %25 = vector.broadcast %cst_15 : f32 to vector<128x128xf32>
      %26 = arith.select %21, %24, %25 : vector<128x128xi1>, vector<128x128xf32>
      %27 = arith.addf %23, %26 : vector<128x128xf32>
      %c0_16 = arith.constant 0 : index
      %c0_17 = arith.constant 0 : index
      %c0_18 = arith.constant 0 : index
      %28 = vector.load %arg3[%c0_16, %c0_17, %c0_18] : memref<1x128x128xf32, #tpu.memory_space<vmem>>, vector<1x128x128xf32>
      %29 = vector.shape_cast %28 : vector<1x128x128xf32> to vector<128x128xf32>
      %30 = vector.shape_cast %27 : vector<128x128xf32> to vector<1x128x128xf32>
      tpu.vector_store %arg3[%c0_16, %c0_17, %c0_18], %30 {strides = array<i32>} : memref<1x128x128xf32, #tpu.memory_space<vmem>>, vector<1x128x128xf32>,
    } else {
    }
    return
  }
  func.func @transform_0(%arg0: i32, %arg1: i32) -> (i32, i32) {
    %c1_i32 = arith.constant 1 : i32
    %0 = arith.muli %arg0, %c1_i32 : i32
    %1 = arith.addi %0, %arg1 : i32
    %c0_i32 = arith.constant 0 : i32
    %c0_i32_0 = arith.constant 0 : i32
    return %1, %c0_i32 : i32, i32
  }
  func.func @transform_1(%arg0: i32, %arg1: i32) -> (i32, i32, i32) {
    %c0_i32 = arith.constant 0 : i32
    %c0_i32_0 = arith.constant 0 : i32
    %c0_i32_1 = arith.constant 0 : i32
    return %arg0, %c0_i32, %c0_i32_0 : i32, i32, i32
  }
}

module attributes {stable_mosaic.version = 11 : i64} {
  func.func @_apply_kernel(%arg0: i32, %arg1: memref<16x128xf32, #tpu.memory_space<vmem>>, %arg2: memref<128x128xf32, #tpu.memory_space<vmem>>, %arg3: memref<16x128xf32, #tpu.memory_space<vmem>>) attributes {dimension_semantics = [#tpu.dimension_semantics<parallel>], iteration_bounds = array<i64: 1>, scalar_prefetch = 0 : i64, scratch_operands = 0 : i64, tpu.core_type = #tpu.core_type<tc>, window_params = [{transform_indices = @transform_0, window_bounds = array<i64: 16, 128>}, {pipeline_mode = #tpu.pipeline_mode<synchronous>, transform_indices = @transform_1, window_bounds = array<i64: 128, 128>}, {transform_indices = @transform_2, window_bounds = array<i64: 16, 128>}]} {
    %c0 = arith.constant 0 : index
    %c0_0 = arith.constant 0 : index
    %0 = vector.load %arg1[%c0, %c0_0] : memref<16x128xf32, #tpu.memory_space<vmem>>, vector<16x128xf32>
    %c0_1 = arith.constant 0 : index
    %c0_2 = arith.constant 0 : index
    %1 = vector.load %arg2[%c0_1, %c0_2] : memref<128x128xf32, #tpu.memory_space<vmem>>, vector<128x128xf32>
    %cst = arith.constant dense<0.000000e+00> : vector<16x128xf32>
    %2 = tpu.matmul %0, %1, %cst {dimension_numbers = #tpu.dot_dimension_numbers<[1], [1], [0], [0], [0, 0, 1, 0], [], []>} : vector<16x128xf32>, vector<128x128xf32>, vector<16x128xf32> -> vector<16x128xf32>
    %c0_3 = arith.constant 0 : index
    %c0_4 = arith.constant 0 : index
    %3 = vector.load %arg3[%c0_3, %c0_4] : memref<16x128xf32, #tpu.memory_space<vmem>>, vector<16x128xf32>
    tpu.vector_store %arg3[%c0_3, %c0_4], %2 {strides = array<i32>} : memref<16x128xf32, #tpu.memory_space<vmem>>, vector<16x128xf32>,
    return
  }
  func.func @transform_0(%arg0: i32) -> (i32, i32) {
    %c0_i32 = arith.constant 0 : i32
    %c0_i32_0 = arith.constant 0 : i32
    return %arg0, %c0_i32 : i32, i32
  }
  func.func @transform_1(%arg0: i32) -> (i32, i32) {
    %c0_i32 = arith.constant 0 : i32
    %c0_i32_0 = arith.constant 0 : i32
    %c0_i32_1 = arith.constant 0 : i32
    return %c0_i32, %c0_i32_0 : i32, i32
  }
  func.func @transform_2(%arg0: i32) -> (i32, i32) {
    %c0_i32 = arith.constant 0 : i32
    %c0_i32_0 = arith.constant 0 : i32
    return %arg0, %c0_i32 : i32, i32
  }
}

</mosaic_0001>

<llo_original>
// kernel: squeeze.1
$region0: #{squeeze.1}
  %s0 = inlined_call_operand.vmem [shape: f32[1,128,128], index: 0, kind: input, shape index: {}]
  %s1 = inlined_call_operand.vmem [shape: f32[8,16,8,16], index: 1, kind: output, shape index: {}]
  %v2 = vld [vmem:[%s0] sm:$0xff]
  %vm3 = vcmask 130048
  %4 = vst.msk [vmem:[%s1] ss:$8 sm:$0xf] %vm3, %v2
  %5 = vst.msk [vmem:[%s1] ss:$8 sm:$0xf0] %vm3, %v2
  %s6 = scalar_lea.vmem %s0, 8
  %v7 = vld [vmem:[%s6] sm:$0xff]
  %vm8 = vcmask 130048
  %s9 = scalar_lea.vmem %s1, 64
  %10 = vst.msk [vmem:[%s9] ss:$8 sm:$0xf] %vm8, %v7
  %s11 = scalar_lea.vmem %s1, 64
  %12 = vst.msk [vmem:[%s11] ss:$8 sm:$0xf0] %vm8, %v7
  %s13 = scalar_lea.vmem %s0, 16
  %v14 = vld [vmem:[%s13] sm:$0xff]
  %vm15 = vcmask 130048
  %s16 = scalar_lea.vmem %s1, 128
  %17 = vst.msk [vmem:[%s16] ss:$8 sm:$0xf] %vm15, %v14
  %s18 = scalar_lea.vmem %s1, 128
  %19 = vst.msk [vmem:[%s18] ss:$8 sm:$0xf0] %vm15, %v14
  %s20 = scalar_lea.vmem %s0, 24
  %v21 = vld [vmem:[%s20] sm:$0xff]
  %vm22 = vcmask 130048
  %s23 = scalar_lea.vmem %s1, 192
  %24 = vst.msk [vmem:[%s23] ss:$8 sm:$0xf] %vm22, %v21
  %s25 = scalar_lea.vmem %s1, 192
  %26 = vst.msk [vmem:[%s25] ss:$8 sm:$0xf0] %vm22, %v21
  %s27 = scalar_lea.vmem %s0, 32
  %v28 = vld [vmem:[%s27] sm:$0xff]
  %vm29 = vcmask 130048
  %s30 = scalar_lea.vmem %s1, 256
  %31 = vst.msk [vmem:[%s30] ss:$8 sm:$0xf] %vm29, %v28
  %s32 = scalar_lea.vmem %s1, 256
  %33 = vst.msk [vmem:[%s32] ss:$8 sm:$0xf0] %vm29, %v28
  %s34 = scalar_lea.vmem %s0, 40
  %v35 = vld [vmem:[%s34] sm:$0xff]
  %vm36 = vcmask 130048
  %s37 = scalar_lea.vmem %s1, 320
  %38 = vst.msk [vmem:[%s37] ss:$8 sm:$0xf] %vm36, %v35
  %s39 = scalar_lea.vmem %s1, 320
  %40 = vst.msk [vmem:[%s39] ss:$8 sm:$0xf0] %vm36, %v35
  %s41 = scalar_lea.vmem %s0, 48
  %v42 = vld [vmem:[%s41] sm:$0xff]
  %vm43 = vcmask 130048
  %s44 = scalar_lea.vmem %s1, 384
  %45 = vst.msk [vmem:[%s44] ss:$8 sm:$0xf] %vm43, %v42
  %s46 = scalar_lea.vmem %s1, 384
  %47 = vst.msk [vmem:[%s46] ss:$8 sm:$0xf0] %vm43, %v42
  %s48 = scalar_lea.vmem %s0, 56
  %v49 = vld [vmem:[%s48] sm:$0xff]
  %vm50 = vcmask 130048
  %s51 = scalar_lea.vmem %s1, 448
  %52 = vst.msk [vmem:[%s51] ss:$8 sm:$0xf] %vm50, %v49
  %s53 = scalar_lea.vmem %s1, 448
  %54 = vst.msk [vmem:[%s53] ss:$8 sm:$0xf0] %vm50, %v49
  %s55 = scalar_lea.vmem %s0, 64
  %v56 = vld [vmem:[%s55] sm:$0xff]
  %vm57 = vcmask 130048
  %s58 = scalar_lea.vmem %s1, 512
  %59 = vst.msk [vmem:[%s58] ss:$8 sm:$0xf] %vm57, %v56
  %s60 = scalar_lea.vmem %s1, 512
  %61 = vst.msk [vmem:[%s60] ss:$8 sm:$0xf0] %vm57, %v56
  %s62 = scalar_lea.vmem %s0, 72
  %v63 = vld [vmem:[%s62] sm:$0xff]
  %vm64 = vcmask 130048
  %s65 = scalar_lea.vmem %s1, 576
  %66 = vst.msk [vmem:[%s65] ss:$8 sm:$0xf] %vm64, %v63
  %s67 = scalar_lea.vmem %s1, 576
  %68 = vst.msk [vmem:[%s67] ss:$8 sm:$0xf0] %vm64, %v63
  %s69 = scalar_lea.vmem %s0, 80
  %v70 = vld [vmem:[%s69] sm:$0xff]
  %vm71 = vcmask 130048
  %s72 = scalar_lea.vmem %s1, 640
  %73 = vst.msk [vmem:[%s72] ss:$8 sm:$0xf] %vm71, %v70
  %s74 = scalar_lea.vmem %s1, 640
  %75 = vst.msk [vmem:[%s74] ss:$8 sm:$0xf0] %vm71, %v70
  %s76 = scalar_lea.vmem %s0, 88
  %v77 = vld [vmem:[%s76] sm:$0xff]
  %vm78 = vcmask 130048
  %s79 = scalar_lea.vmem %s1, 704
  %80 = vst.msk [vmem:[%s79] ss:$8 sm:$0xf] %vm78, %v77
  %s81 = scalar_lea.vmem %s1, 704
  %82 = vst.msk [vmem:[%s81] ss:$8 sm:$0xf0] %vm78, %v77
  %s83 = scalar_lea.vmem %s0, 96
  %v84 = vld [vmem:[%s83] sm:$0xff]
  %vm85 = vcmask 130048
  %s86 = scalar_lea.vmem %s1, 768
  %87 = vst.msk [vmem:[%s86] ss:$8 sm:$0xf] %vm85, %v84
  %s88 = scalar_lea.vmem %s1, 768
  %89 = vst.msk [vmem:[%s88] ss:$8 sm:$0xf0] %vm85, %v84
  %s90 = scalar_lea.vmem %s0, 104
  %v91 = vld [vmem:[%s90] sm:$0xff]
  %vm92 = vcmask 130048
  %s93 = scalar_lea.vmem %s1, 832
  %94 = vst.msk [vmem:[%s93] ss:$8 sm:$0xf] %vm92, %v91
  %s95 = scalar_lea.vmem %s1, 832
  %96 = vst.msk [vmem:[%s95] ss:$8 sm:$0xf0] %vm92, %v91
  %s97 = scalar_lea.vmem %s0, 112
  %v98 = vld [vmem:[%s97] sm:$0xff]
  %vm99 = vcmask 130048
  %s100 = scalar_lea.vmem %s1, 896
  %101 = vst.msk [vmem:[%s100] ss:$8 sm:$0xf] %vm99, %v98
  %s102 = scalar_lea.vmem %s1, 896
  %103 = vst.msk [vmem:[%s102] ss:$8 sm:$0xf0] %vm99, %v98
  %s104 = scalar_lea.vmem %s0, 120
  %v105 = vld [vmem:[%s104] sm:$0xff]
  %vm106 = vcmask 130048
  %s107 = scalar_lea.vmem %s1, 960
  %108 = vst.msk [vmem:[%s107] ss:$8 sm:$0xf] %vm106, %v105
  %s109 = scalar_lea.vmem %s1, 960
  %110 = vst.msk [vmem:[%s109] ss:$8 sm:$0xf0] %vm106, %v105
  %v111 = vld [vmem:[%s0] sm:$0xff]
  %112 = vrot.lane.b32.xlu0 %v111, 112
  %v113 = vpop.permute.xlu0 %112
  %vm114 = vcmask 130048
  %s115 = scalar_lea.vmem %s1, 1
  %116 = vst.msk [vmem:[%s115] ss:$8 sm:$0xf] %vm114, %v113
  %s117 = scalar_lea.vmem %s1, 1
  %118 = vst.msk [vmem:[%s117] ss:$8 sm:$0xf0] %vm114, %v113
  %s119 = scalar_lea.vmem %s0, 8
  %v120 = vld [vmem:[%s119] sm:$0xff]
  %121 = vrot.lane.b32.xlu0 %v120, 112
  %v122 = vpop.permute.xlu0 %121
  %vm123 = vcmask 130048
  %s124 = scalar_lea.vmem %s1, 65
  %125 = vst.msk [vmem:[%s124] ss:$8 sm:$0xf] %vm123, %v122
  %s126 = scalar_lea.vmem %s1, 65
  %127 = vst.msk [vmem:[%s126] ss:$8 sm:$0xf0] %vm123, %v122
  %s128 = scalar_lea.vmem %s0, 16
  %v129 = vld [vmem:[%s128] sm:$0xff]
  %130 = vrot.lane.b32.xlu0 %v129, 112
  %v131 = vpop.permute.xlu0 %130
  %vm132 = vcmask 130048
  %s133 = scalar_lea.vmem %s1, 129
  %134 = vst.msk [vmem:[%s133] ss:$8 sm:$0xf] %vm132, %v131
  %s135 = scalar_lea.vmem %s1, 129
  %136 = vst.msk [vmem:[%s135] ss:$8 sm:$0xf0] %vm132, %v131
  %s137 = scalar_lea.vmem %s0, 24
  %v138 = vld [vmem:[%s137] sm:$0xff]
  %139 = vrot.lane.b32.xlu0 %v138, 112
  %v140 = vpop.permute.xlu0 %139
  %vm141 = vcmask 130048
  %s142 = scalar_lea.vmem %s1, 193
  %143 = vst.msk [vmem:[%s142] ss:$8 sm:$0xf] %vm141, %v140
  %s144 = scalar_lea.vmem %s1, 193
  %145 = vst.msk [vmem:[%s144] ss:$8 sm:$0xf0] %vm141, %v140
  %s146 = scalar_lea.vmem %s0, 32
  %v147 = vld [vmem:[%s146] sm:$0xff]
  %148 = vrot.lane.b32.xlu0 %v147, 112
  %v149 = vpop.permute.xlu0 %148
  %vm150 = vcmask 130048
  %s151 = scalar_lea.vmem %s1, 257
  %152 = vst.msk [vmem:[%s151] ss:$8 sm:$0xf] %vm150, %v149
  %s153 = scalar_lea.vmem %s1, 257
  %154 = vst.msk [vmem:[%s153] ss:$8 sm:$0xf0] %vm150, %v149
  %s155 = scalar_lea.vmem %s0, 40
  %v156 = vld [vmem:[%s155] sm:$0xff]
  %157 = vrot.lane.b32.xlu0 %v156, 112
  %v158 = vpop.permute.xlu0 %157
  %vm159 = vcmask 130048
  %s160 = scalar_lea.vmem %s1, 321
  %161 = vst.msk [vmem:[%s160] ss:$8 sm:$0xf] %vm159, %v158
  %s162 = scalar_lea.vmem %s1, 321
  %163 = vst.msk [vmem:[%s162] ss:$8 sm:$0xf0] %vm159, %v158
  %s164 = scalar_lea.vmem %s0, 48
  %v165 = vld [vmem:[%s164] sm:$0xff]
  %166 = vrot.lane.b32.xlu0 %v165, 112
  %v167 = vpop.permute.xlu0 %166
  %vm168 = vcmask 130048
  %s169 = scalar_lea.vmem %s1, 385
  %170 = vst.msk [vmem:[%s169] ss:$8 sm:$0xf] %vm168, %v167
  %s171 = scalar_lea.vmem %s1, 385
  %172 = vst.msk [vmem:[%s171] ss:$8 sm:$0xf0] %vm168, %v167
  %s173 = scalar_lea.vmem %s0, 56
  %v174 = vld [vmem:[%s173] sm:$0xff]
  %175 = vrot.lane.b32.xlu0 %v174, 112
  %v176 = vpop.permute.xlu0 %175
  %vm177 = vcmask 130048
  %s178 = scalar_lea.vmem %s1, 449
  %179 = vst.msk [vmem:[%s178] ss:$8 sm:$0xf] %vm177, %v176
  %s180 = scalar_lea.vmem %s1, 449
  %181 = vst.msk [vmem:[%s180] ss:$8 sm:$0xf0] %vm177, %v176
  %s182 = scalar_lea.vmem %s0, 64
  %v183 = vld [vmem:[%s182] sm:$0xff]
  %184 = vrot.lane.b32.xlu0 %v183, 112
  %v185 = vpop.permute.xlu0 %184
  %vm186 = vcmask 130048
  %s187 = scalar_lea.vmem %s1, 513
  %188 = vst.msk [vmem:[%s187] ss:$8 sm:$0xf] %vm186, %v185
  %s189 = scalar_lea.vmem %s1, 513
  %190 = vst.msk [vmem:[%s189] ss:$8 sm:$0xf0] %vm186, %v185
  %s191 = scalar_lea.vmem %s0, 72
  %v192 = vld [vmem:[%s191] sm:$0xff]
  %193 = vrot.lane.b32.xlu0 %v192, 112
  %v194 = vpop.permute.xlu0 %193
  %vm195 = vcmask 130048
  %s196 = scalar_lea.vmem %s1, 577
  %197 = vst.msk [vmem:[%s196] ss:$8 sm:$0xf] %vm195, %v194
  %s198 = scalar_lea.vmem %s1, 577
  %199 = vst.msk [vmem:[%s198] ss:$8 sm:$0xf0] %vm195, %v194
  %s200 = scalar_lea.vmem %s0, 80
  %v201 = vld [vmem:[%s200] sm:$0xff]
  %202 = vrot.lane.b32.xlu0 %v201, 112
  %v203 = vpop.permute.xlu0 %202
  %vm204 = vcmask 130048
  %s205 = scalar_lea.vmem %s1, 641
  %206 = vst.msk [vmem:[%s205] ss:$8 sm:$0xf] %vm204, %v203
  %s207 = scalar_lea.vmem %s1, 641
  %208 = vst.msk [vmem:[%s207] ss:$8 sm:$0xf0] %vm204, %v203
  %s209 = scalar_lea.vmem %s0, 88
  %v210 = vld [vmem:[%s209] sm:$0xff]
  %211 = vrot.lane.b32.xlu0 %v210, 112
  %v212 = vpop.permute.xlu0 %211
  %vm213 = vcmask 130048
  %s214 = scalar_lea.vmem %s1, 705
  %215 = vst.msk [vmem:[%s214] ss:$8 sm:$0xf] %vm213, %v212
  %s216 = scalar_lea.vmem %s1, 705
  %217 = vst.msk [vmem:[%s216] ss:$8 sm:$0xf0] %vm213, %v212
  %s218 = scalar_lea.vmem %s0, 96
  %v219 = vld [vmem:[%s218] sm:$0xff]
  %220 = vrot.lane.b32.xlu0 %v219, 112
  %v221 = vpop.permute.xlu0 %220
  %vm222 = vcmask 130048
  %s223 = scalar_lea.vmem %s1, 769
  %224 = vst.msk [vmem:[%s223] ss:$8 sm:$0xf] %vm222, %v221
  %s225 = scalar_lea.vmem %s1, 769
  %226 = vst.msk [vmem:[%s225] ss:$8 sm:$0xf0] %vm222, %v221
  %s227 = scalar_lea.vmem %s0, 104
  %v228 = vld [vmem:[%s227] sm:$0xff]
  %229 = vrot.lane.b32.xlu0 %v228, 112
  %v230 = vpop.permute.xlu0 %229
  %vm231 = vcmask 130048
  %s232 = scalar_lea.vmem %s1, 833
  %233 = vst.msk [vmem:[%s232] ss:$8 sm:$0xf] %vm231, %v230
  %s234 = scalar_lea.vmem %s1, 833
  %235 = vst.msk [vmem:[%s234] ss:$8 sm:$0xf0] %vm231, %v230
  %s236 = scalar_lea.vmem %s0, 112
  %v237 = vld [vmem:[%s236] sm:$0xff]
  %238 = vrot.lane.b32.xlu0 %v237, 112
  %v239 = vpop.permute.xlu0 %238
  %vm240 = vcmask 130048
  %s241 = scalar_lea.vmem %s1, 897
  %242 = vst.msk [vmem:[%s241] ss:$8 sm:$0xf] %vm240, %v239
  %s243 = scalar_lea.vmem %s1, 897
  %244 = vst.msk [vmem:[%s243] ss:$8 sm:$0xf0] %vm240, %v239
  %s245 = scalar_lea.vmem %s0, 120
  %v246 = vld [vmem:[%s245] sm:$0xff]
  %247 = vrot.lane.b32.xlu0 %v246, 112
  %v248 = vpop.permute.xlu0 %247
  %vm249 = vcmask 130048
  %s250 = scalar_lea.vmem %s1, 961
  %251 = vst.msk [vmem:[%s250] ss:$8 sm:$0xf] %vm249, %v248
  %s252 = scalar_lea.vmem %s1, 961
  %253 = vst.msk [vmem:[%s252] ss:$8 sm:$0xf0] %vm249, %v248
  %v254 = vld [vmem:[%s0] sm:$0xff]
  %255 = vrot.lane.b32.xlu0 %v254, 96
  %v256 = vpop.permute.xlu0 %255
  %vm257 = vcmask 130048
  %s258 = scalar_lea.vmem %s1, 2
  %259 = vst.msk [vmem:[%s258] ss:$8 sm:$0xf] %vm257, %v256
  %s260 = scalar_lea.vmem %s1, 2
  %261 = vst.msk [vmem:[%s260] ss:$8 sm:$0xf0] %vm257, %v256
  %s262 = scalar_lea.vmem %s0, 8
  %v263 = vld [vmem:[%s262] sm:$0xff]
  %264 = vrot.lane.b32.xlu0 %v263, 96
  %v265 = vpop.permute.xlu0 %264
  %vm266 = vcmask 130048
  %s267 = scalar_lea.vmem %s1, 66
  %268 = vst.msk [vmem:[%s267] ss:$8 sm:$0xf] %vm266, %v265
  %s269 = scalar_lea.vmem %s1, 66
  %270 = vst.msk [vmem:[%s269] ss:$8 sm:$0xf0] %vm266, %v265
  %s271 = scalar_lea.vmem %s0, 16
  %v272 = vld [vmem:[%s271] sm:$0xff]
  %273 = vrot.lane.b32.xlu0 %v272, 96
  %v274 = vpop.permute.xlu0 %273
  %vm275 = vcmask 130048
  %s276 = scalar_lea.vmem %s1, 130
  %277 = vst.msk [vmem:[%s276] ss:$8 sm:$0xf] %vm275, %v274
  %s278 = scalar_lea.vmem %s1, 130
  %279 = vst.msk [vmem:[%s278] ss:$8 sm:$0xf0] %vm275, %v274
  %s280 = scalar_lea.vmem %s0, 24
  %v281 = vld [vmem:[%s280] sm:$0xff]
  %282 = vrot.lane.b32.xlu0 %v281, 96
  %v283 = vpop.permute.xlu0 %282
  %vm284 = vcmask 130048
  %s285 = scalar_lea.vmem %s1, 194
  %286 = vst.msk [vmem:[%s285] ss:$8 sm:$0xf] %vm284, %v283
  %s287 = scalar_lea.vmem %s1, 194
  %288 = vst.msk [vmem:[%s287] ss:$8 sm:$0xf0] %vm284, %v283
  %s289 = scalar_lea.vmem %s0, 32
  %v290 = vld [vmem:[%s289] sm:$0xff]
  %291 = vrot.lane.b32.xlu0 %v290, 96
  %v292 = vpop.permute.xlu0 %291
  %vm293 = vcmask 130048
  %s294 = scalar_lea.vmem %s1, 258
  %295 = vst.msk [vmem:[%s294] ss:$8 sm:$0xf] %vm293, %v292
  %s296 = scalar_lea.vmem %s1, 258
  %297 = vst.msk [vmem:[%s296] ss:$8 sm:$0xf0] %vm293, %v292
  %s298 = scalar_lea.vmem %s0, 40
  %v299 = vld [vmem:[%s298] sm:$0xff]
  %300 = vrot.lane.b32.xlu0 %v299, 96
  %v301 = vpop.permute.xlu0 %300
  %vm302 = vcmask 130048
  %s303 = scalar_lea.vmem %s1, 322
  %304 = vst.msk [vmem:[%s303] ss:$8 sm:$0xf] %vm302, %v301
  %s305 = scalar_lea.vmem %s1, 322
  %306 = vst.msk [vmem:[%s305] ss:$8 sm:$0xf0] %vm302, %v301
  %s307 = scalar_lea.vmem %s0, 48
  %v308 = vld [vmem:[%s307] sm:$0xff]
  %309 = vrot.lane.b32.xlu0 %v308, 96
  %v310 = vpop.permute.xlu0 %309
  %vm311 = vcmask 130048
  %s312 = scalar_lea.vmem %s1, 386
  %313 = vst.msk [vmem:[%s312] ss:$8 sm:$0xf] %vm311, %v310
  %s314 = scalar_lea.vmem %s1, 386
  %315 = vst.msk [vmem:[%s314] ss:$8 sm:$0xf0] %vm311, %v310
  %s316 = scalar_lea.vmem %s0, 56
  %v317 = vld [vmem:[%s316] sm:$0xff]
  %318 = vrot.lane.b32.xlu0 %v317, 96
  %v319 = vpop.permute.xlu0 %318
  %vm320 = vcmask 130048
  %s321 = scalar_lea.vmem %s1, 450
  %322 = vst.msk [vmem:[%s321] ss:$8 sm:$0xf] %vm320, %v319
  %s323 = scalar_lea.vmem %s1, 450
  %324 = vst.msk [vmem:[%s323] ss:$8 sm:$0xf0] %vm320, %v319
  %s325 = scalar_lea.vmem %s0, 64
  %v326 = vld [vmem:[%s325] sm:$0xff]
  %327 = vrot.lane.b32.xlu0 %v326, 96
  %v328 = vpop.permute.xlu0 %327
  %vm329 = vcmask 130048
  %s330 = scalar_lea.vmem %s1, 514
  %331 = vst.msk [vmem:[%s330] ss:$8 sm:$0xf] %vm329, %v328
  %s332 = scalar_lea.vmem %s1, 514
  %333 = vst.msk [vmem:[%s332] ss:$8 sm:$0xf0] %vm329, %v328
  %s334 = scalar_lea.vmem %s0, 72
  %v335 = vld [vmem:[%s334] sm:$0xff]
  %336 = vrot.lane.b32.xlu0 %v335, 96
  %v337 = vpop.permute.xlu0 %336
  %vm338 = vcmask 130048
  %s339 = scalar_lea.vmem %s1, 578
  %340 = vst.msk [vmem:[%s339] ss:$8 sm:$0xf] %vm338, %v337
  %s341 = scalar_lea.vmem %s1, 578
  %342 = vst.msk [vmem:[%s341] ss:$8 sm:$0xf0] %vm338, %v337
  %s343 = scalar_lea.vmem %s0, 80
  %v344 = vld [vmem:[%s343] sm:$0xff]
  %345 = vrot.lane.b32.xlu0 %v344, 96
  %v346 = vpop.permute.xlu0 %345
  %vm347 = vcmask 130048
  %s348 = scalar_lea.vmem %s1, 642
  %349 = vst.msk [vmem:[%s348] ss:$8 sm:$0xf] %vm347, %v346
  %s350 = scalar_lea.vmem %s1, 642
  %351 = vst.msk [vmem:[%s350] ss:$8 sm:$0xf0] %vm347, %v346
  %s352 = scalar_lea.vmem %s0, 88
  %v353 = vld [vmem:[%s352] sm:$0xff]
  %354 = vrot.lane.b32.xlu0 %v353, 96
  %v355 = vpop.permute.xlu0 %354
  %vm356 = vcmask 130048
  %s357 = scalar_lea.vmem %s1, 706
  %358 = vst.msk [vmem:[%s357] ss:$8 sm:$0xf] %vm356, %v355
  %s359 = scalar_lea.vmem %s1, 706
  %360 = vst.msk [vmem:[%s359] ss:$8 sm:$0xf0] %vm356, %v355
  %s361 = scalar_lea.vmem %s0, 96
  %v362 = vld [vmem:[%s361] sm:$0xff]
  %363 = vrot.lane.b32.xlu0 %v362, 96
  %v364 = vpop.permute.xlu0 %363
  %vm365 = vcmask 130048
  %s366 = scalar_lea.vmem %s1, 770
  %367 = vst.msk [vmem:[%s366] ss:$8 sm:$0xf] %vm365, %v364
  %s368 = scalar_lea.vmem %s1, 770
  %369 = vst.msk [vmem:[%s368] ss:$8 sm:$0xf0] %vm365, %v364
  %s370 = scalar_lea.vmem %s0, 104
  %v371 = vld [vmem:[%s370] sm:$0xff]
  %372 = vrot.lane.b32.xlu0 %v371, 96
  %v373 = vpop.permute.xlu0 %372
  %vm374 = vcmask 130048
  %s375 = scalar_lea.vmem %s1, 834
  %376 = vst.msk [vmem:[%s375] ss:$8 sm:$0xf] %vm374, %v373
  %s377 = scalar_lea.vmem %s1, 834
  %378 = vst.msk [vmem:[%s377] ss:$8 sm:$0xf0] %vm374, %v373
  %s379 = scalar_lea.vmem %s0, 112
  %v380 = vld [vmem:[%s379] sm:$0xff]
  %381 = vrot.lane.b32.xlu0 %v380, 96
  %v382 = vpop.permute.xlu0 %381
  %vm383 = vcmask 130048
  %s384 = scalar_lea.vmem %s1, 898
  %385 = vst.msk [vmem:[%s384] ss:$8 sm:$0xf] %vm383, %v382
  %s386 = scalar_lea.vmem %s1, 898
  %387 = vst.msk [vmem:[%s386] ss:$8 sm:$0xf0] %vm383, %v382
  %s388 = scalar_lea.vmem %s0, 120
  %v389 = vld [vmem:[%s388] sm:$0xff]
  %390 = vrot.lane.b32.xlu0 %v389, 96
  %v391 = vpop.permute.xlu0 %390
  %vm392 = vcmask 130048
  %s393 = scalar_lea.vmem %s1, 962
  %394 = vst.msk [vmem:[%s393] ss:$8 sm:$0xf] %vm392, %v391
  %s395 = scalar_lea.vmem %s1, 962
  %396 = vst.msk [vmem:[%s395] ss:$8 sm:$0xf0] %vm392, %v391
  %v397 = vld [vmem:[%s0] sm:$0xff]
  %398 = vrot.lane.b32.xlu0 %v397, 80
  %v399 = vpop.permute.xlu0 %398
  %vm400 = vcmask 130048
  %s401 = scalar_lea.vmem %s1, 3
  %402 = vst.msk [vmem:[%s401] ss:$8 sm:$0xf] %vm400, %v399
  %s403 = scalar_lea.vmem %s1, 3
  %404 = vst.msk [vmem:[%s403] ss:$8 sm:$0xf0] %vm400, %v399
  %s405 = scalar_lea.vmem %s0, 8
  %v406 = vld [vmem:[%s405] sm:$0xff]
  %407 = vrot.lane.b32.xlu0 %v406, 80
  %v408 = vpop.permute.xlu0 %407
  %vm409 = vcmask 130048
  %s410 = scalar_lea.vmem %s1, 67
  %411 = vst.msk [vmem:[%s410] ss:$8 sm:$0xf] %vm409, %v408
  %s412 = scalar_lea.vmem %s1, 67
  %413 = vst.msk [vmem:[%s412] ss:$8 sm:$0xf0] %vm409, %v408
  %s414 = scalar_lea.vmem %s0, 16
  %v415 = vld [vmem:[%s414] sm:$0xff]
  %416 = vrot.lane.b32.xlu0 %v415, 80
  %v417 = vpop.permute.xlu0 %416
  %vm418 = vcmask 130048
  %s419 = scalar_lea.vmem %s1, 131
  %420 = vst.msk [vmem:[%s419] ss:$8 sm:$0xf] %vm418, %v417
  %s421 = scalar_lea.vmem %s1, 131
  %422 = vst.msk [vmem:[%s421] ss:$8 sm:$0xf0] %vm418, %v417
  %s423 = scalar_lea.vmem %s0, 24
  %v424 = vld [vmem:[%s423] sm:$0xff]
  %425 = vrot.lane.b32.xlu0 %v424, 80
  %v426 = vpop.permute.xlu0 %425
  %vm427 = vcmask 130048
  %s428 = scalar_lea.vmem %s1, 195
  %429 = vst.msk [vmem:[%s428] ss:$8 sm:$0xf] %vm427, %v426
  %s430 = scalar_lea.vmem %s1, 195
  %431 = vst.msk [vmem:[%s430] ss:$8 sm:$0xf0] %vm427, %v426
  %s432 = scalar_lea.vmem %s0, 32
  %v433 = vld [vmem:[%s432] sm:$0xff]
  %434 = vrot.lane.b32.xlu0 %v433, 80
  %v435 = vpop.permute.xlu0 %434
  %vm436 = vcmask 130048
  %s437 = scalar_lea.vmem %s1, 259
  %438 = vst.msk [vmem:[%s437] ss:$8 sm:$0xf] %vm436, %v435
  %s439 = scalar_lea.vmem %s1, 259
  %440 = vst.msk [vmem:[%s439] ss:$8 sm:$0xf0] %vm436, %v435
  %s441 = scalar_lea.vmem %s0, 40
  %v442 = vld [vmem:[%s441] sm:$0xff]
  %443 = vrot.lane.b32.xlu0 %v442, 80
  %v444 = vpop.permute.xlu0 %443
  %vm445 = vcmask 130048
  %s446 = scalar_lea.vmem %s1, 323
  %447 = vst.msk [vmem:[%s446] ss:$8 sm:$0xf] %vm445, %v444
  %s448 = scalar_lea.vmem %s1, 323
  %449 = vst.msk [vmem:[%s448] ss:$8 sm:$0xf0] %vm445, %v444
  %s450 = scalar_lea.vmem %s0, 48
  %v451 = vld [vmem:[%s450] sm:$0xff]
  %452 = vrot.lane.b32.xlu0 %v451, 80
  %v453 = vpop.permute.xlu0 %452
  %vm454 = vcmask 130048
  %s455 = scalar_lea.vmem %s1, 387
  %456 = vst.msk [vmem:[%s455] ss:$8 sm:$0xf] %vm454, %v453
  %s457 = scalar_lea.vmem %s1, 387
  %458 = vst.msk [vmem:[%s457] ss:$8 sm:$0xf0] %vm454, %v453
  %s459 = scalar_lea.vmem %s0, 56
  %v460 = vld [vmem:[%s459] sm:$0xff]
  %461 = vrot.lane.b32.xlu0 %v460, 80
  %v462 = vpop.permute.xlu0 %461
  %vm463 = vcmask 130048
  %s464 = scalar_lea.vmem %s1, 451
  %465 = vst.msk [vmem:[%s464] ss:$8 sm:$0xf] %vm463, %v462
  %s466 = scalar_lea.vmem %s1, 451
  %467 = vst.msk [vmem:[%s466] ss:$8 sm:$0xf0] %vm463, %v462
  %s468 = scalar_lea.vmem %s0, 64
  %v469 = vld [vmem:[%s468] sm:$0xff]
  %470 = vrot.lane.b32.xlu0 %v469, 80
  %v471 = vpop.permute.xlu0 %470
  %vm472 = vcmask 130048
  %s473 = scalar_lea.vmem %s1, 515
  %474 = vst.msk [vmem:[%s473] ss:$8 sm:$0xf] %vm472, %v471
  %s475 = scalar_lea.vmem %s1, 515
  %476 = vst.msk [vmem:[%s475] ss:$8 sm:$0xf0] %vm472, %v471
  %s477 = scalar_lea.vmem %s0, 72
  %v478 = vld [vmem:[%s477] sm:$0xff]
  %479 = vrot.lane.b32.xlu0 %v478, 80
  %v480 = vpop.permute.xlu0 %479
  %vm481 = vcmask 130048
  %s482 = scalar_lea.vmem %s1, 579
  %483 = vst.msk [vmem:[%s482] ss:$8 sm:$0xf] %vm481, %v480
  %s484 = scalar_lea.vmem %s1, 579
  %485 = vst.msk [vmem:[%s484] ss:$8 sm:$0xf0] %vm481, %v480
  %s486 = scalar_lea.vmem %s0, 80
  %v487 = vld [vmem:[%s486] sm:$0xff]
  %488 = vrot.lane.b32.xlu0 %v487, 80
  %v489 = vpop.permute.xlu0 %488
  %vm490 = vcmask 130048
  %s491 = scalar_lea.vmem %s1, 643
  %492 = vst.msk [vmem:[%s491] ss:$8 sm:$0xf] %vm490, %v489
  %s493 = scalar_lea.vmem %s1, 643
  %494 = vst.msk [vmem:[%s493] ss:$8 sm:$0xf0] %vm490, %v489
  %s495 = scalar_lea.vmem %s0, 88
  %v496 = vld [vmem:[%s495] sm:$0xff]
  %497 = vrot.lane.b32.xlu0 %v496, 80
  %v498 = vpop.permute.xlu0 %497
  %vm499 = vcmask 130048
  %s500 = scalar_lea.vmem %s1, 707
  %501 = vst.msk [vmem:[%s500] ss:$8 sm:$0xf] %vm499, %v498
  %s502 = scalar_lea.vmem %s1, 707
  %503 = vst.msk [vmem:[%s502] ss:$8 sm:$0xf0] %vm499, %v498
  %s504 = scalar_lea.vmem %s0, 96
  %v505 = vld [vmem:[%s504] sm:$0xff]
  %506 = vrot.lane.b32.xlu0 %v505, 80
  %v507 = vpop.permute.xlu0 %506
  %vm508 = vcmask 130048
  %s509 = scalar_lea.vmem %s1, 771
  %510 = vst.msk [vmem:[%s509] ss:$8 sm:$0xf] %vm508, %v507
  %s511 = scalar_lea.vmem %s1, 771
  %512 = vst.msk [vmem:[%s511] ss:$8 sm:$0xf0] %vm508, %v507
  %s513 = scalar_lea.vmem %s0, 104
  %v514 = vld [vmem:[%s513] sm:$0xff]
  %515 = vrot.lane.b32.xlu0 %v514, 80
  %v516 = vpop.permute.xlu0 %515
  %vm517 = vcmask 130048
  %s518 = scalar_lea.vmem %s1, 835
  %519 = vst.msk [vmem:[%s518] ss:$8 sm:$0xf] %vm517, %v516
  %s520 = scalar_lea.vmem %s1, 835
  %521 = vst.msk [vmem:[%s520] ss:$8 sm:$0xf0] %vm517, %v516
  %s522 = scalar_lea.vmem %s0, 112
  %v523 = vld [vmem:[%s522] sm:$0xff]
  %524 = vrot.lane.b32.xlu0 %v523, 80
  %v525 = vpop.permute.xlu0 %524
  %vm526 = vcmask 130048
  %s527 = scalar_lea.vmem %s1, 899
  %528 = vst.msk [vmem:[%s527] ss:$8 sm:$0xf] %vm526, %v525
  %s529 = scalar_lea.vmem %s1, 899
  %530 = vst.msk [vmem:[%s529] ss:$8 sm:$0xf0] %vm526, %v525
  %s531 = scalar_lea.vmem %s0, 120
  %v532 = vld [vmem:[%s531] sm:$0xff]
  %533 = vrot.lane.b32.xlu0 %v532, 80
  %v534 = vpop.permute.xlu0 %533
  %vm535 = vcmask 130048
  %s536 = scalar_lea.vmem %s1, 963
  %537 = vst.msk [vmem:[%s536] ss:$8 sm:$0xf] %vm535, %v534
  %s538 = scalar_lea.vmem %s1, 963
  %539 = vst.msk [vmem:[%s538] ss:$8 sm:$0xf0] %vm535, %v534
  %v540 = vld [vmem:[%s0] sm:$0xff]
  %541 = vrot.lane.b32.xlu0 %v540, 64
  %v542 = vpop.permute.xlu0 %541
  %vm543 = vcmask 130048
  %s544 = scalar_lea.vmem %s1, 4
  %545 = vst.msk [vmem:[%s544] ss:$8 sm:$0xf] %vm543, %v542
  %s546 = scalar_lea.vmem %s1, 4
  %547 = vst.msk [vmem:[%s546] ss:$8 sm:$0xf0] %vm543, %v542
  %s548 = scalar_lea.vmem %s0, 8
  %v549 = vld [vmem:[%s548] sm:$0xff]
  %550 = vrot.lane.b32.xlu0 %v549, 64
  %v551 = vpop.permute.xlu0 %550
  %vm552 = vcmask 130048
  %s553 = scalar_lea.vmem %s1, 68
  %554 = vst.msk [vmem:[%s553] ss:$8 sm:$0xf] %vm552, %v551
  %s555 = scalar_lea.vmem %s1, 68
  %556 = vst.msk [vmem:[%s555] ss:$8 sm:$0xf0] %vm552, %v551
  %s557 = scalar_lea.vmem %s0, 16
  %v558 = vld [vmem:[%s557] sm:$0xff]
  %559 = vrot.lane.b32.xlu0 %v558, 64
  %v560 = vpop.permute.xlu0 %559
  %vm561 = vcmask 130048
  %s562 = scalar_lea.vmem %s1, 132
  %563 = vst.msk [vmem:[%s562] ss:$8 sm:$0xf] %vm561, %v560
  %s564 = scalar_lea.vmem %s1, 132
  %565 = vst.msk [vmem:[%s564] ss:$8 sm:$0xf0] %vm561, %v560
  %s566 = scalar_lea.vmem %s0, 24
  %v567 = vld [vmem:[%s566] sm:$0xff]
  %568 = vrot.lane.b32.xlu0 %v567, 64
  %v569 = vpop.permute.xlu0 %568
  %vm570 = vcmask 130048
  %s571 = scalar_lea.vmem %s1, 196
  %572 = vst.msk [vmem:[%s571] ss:$8 sm:$0xf] %vm570, %v569
  %s573 = scalar_lea.vmem %s1, 196
  %574 = vst.msk [vmem:[%s573] ss:$8 sm:$0xf0] %vm570, %v569
  %s575 = scalar_lea.vmem %s0, 32
  %v576 = vld [vmem:[%s575] sm:$0xff]
  %577 = vrot.lane.b32.xlu0 %v576, 64
  %v578 = vpop.permute.xlu0 %577
  %vm579 = vcmask 130048
  %s580 = scalar_lea.vmem %s1, 260
  %581 = vst.msk [vmem:[%s580] ss:$8 sm:$0xf] %vm579, %v578
  %s582 = scalar_lea.vmem %s1, 260
  %583 = vst.msk [vmem:[%s582] ss:$8 sm:$0xf0] %vm579, %v578
  %s584 = scalar_lea.vmem %s0, 40
  %v585 = vld [vmem:[%s584] sm:$0xff]
  %586 = vrot.lane.b32.xlu0 %v585, 64
  %v587 = vpop.permute.xlu0 %586
  %vm588 = vcmask 130048
  %s589 = scalar_lea.vmem %s1, 324
  %590 = vst.msk [vmem:[%s589] ss:$8 sm:$0xf] %vm588, %v587
  %s591 = scalar_lea.vmem %s1, 324
  %592 = vst.msk [vmem:[%s591] ss:$8 sm:$0xf0] %vm588, %v587
  %s593 = scalar_lea.vmem %s0, 48
  %v594 = vld [vmem:[%s593] sm:$0xff]
  %595 = vrot.lane.b32.xlu0 %v594, 64
  %v596 = vpop.permute.xlu0 %595
  %vm597 = vcmask 130048
  %s598 = scalar_lea.vmem %s1, 388
  %599 = vst.msk [vmem:[%s598] ss:$8 sm:$0xf] %vm597, %v596
  %s600 = scalar_lea.vmem %s1, 388
  %601 = vst.msk [vmem:[%s600] ss:$8 sm:$0xf0] %vm597, %v596
  %s602 = scalar_lea.vmem %s0, 56
  %v603 = vld [vmem:[%s602] sm:$0xff]
  %604 = vrot.lane.b32.xlu0 %v603, 64
  %v605 = vpop.permute.xlu0 %604
  %vm606 = vcmask 130048
  %s607 = scalar_lea.vmem %s1, 452
  %608 = vst.msk [vmem:[%s607] ss:$8 sm:$0xf] %vm606, %v605
  %s609 = scalar_lea.vmem %s1, 452
  %610 = vst.msk [vmem:[%s609] ss:$8 sm:$0xf0] %vm606, %v605
  %s611 = scalar_lea.vmem %s0, 64
  %v612 = vld [vmem:[%s611] sm:$0xff]
  %613 = vrot.lane.b32.xlu0 %v612, 64
  %v614 = vpop.permute.xlu0 %613
  %vm615 = vcmask 130048
  %s616 = scalar_lea.vmem %s1, 516
  %617 = vst.msk [vmem:[%s616] ss:$8 sm:$0xf] %vm615, %v614
  %s618 = scalar_lea.vmem %s1, 516
  %619 = vst.msk [vmem:[%s618] ss:$8 sm:$0xf0] %vm615, %v614
  %s620 = scalar_lea.vmem %s0, 72
  %v621 = vld [vmem:[%s620] sm:$0xff]
  %622 = vrot.lane.b32.xlu0 %v621, 64
  %v623 = vpop.permute.xlu0 %622
  %vm624 = vcmask 130048
  %s625 = scalar_lea.vmem %s1, 580
  %626 = vst.msk [vmem:[%s625] ss:$8 sm:$0xf] %vm624, %v623
  %s627 = scalar_lea.vmem %s1, 580
  %628 = vst.msk [vmem:[%s627] ss:$8 sm:$0xf0] %vm624, %v623
  %s629 = scalar_lea.vmem %s0, 80
  %v630 = vld [vmem:[%s629] sm:$0xff]
  %631 = vrot.lane.b32.xlu0 %v630, 64
  %v632 = vpop.permute.xlu0 %631
  %vm633 = vcmask 130048
  %s634 = scalar_lea.vmem %s1, 644
  %635 = vst.msk [vmem:[%s634] ss:$8 sm:$0xf] %vm633, %v632
  %s636 = scalar_lea.vmem %s1, 644
  %637 = vst.msk [vmem:[%s636] ss:$8 sm:$0xf0] %vm633, %v632
  %s638 = scalar_lea.vmem %s0, 88
  %v639 = vld [vmem:[%s638] sm:$0xff]
  %640 = vrot.lane.b32.xlu0 %v639, 64
  %v641 = vpop.permute.xlu0 %640
  %vm642 = vcmask 130048
  %s643 = scalar_lea.vmem %s1, 708
  %644 = vst.msk [vmem:[%s643] ss:$8 sm:$0xf] %vm642, %v641
  %s645 = scalar_lea.vmem %s1, 708
  %646 = vst.msk [vmem:[%s645] ss:$8 sm:$0xf0] %vm642, %v641
  %s647 = scalar_lea.vmem %s0, 96
  %v648 = vld [vmem:[%s647] sm:$0xff]
  %649 = vrot.lane.b32.xlu0 %v648, 64
  %v650 = vpop.permute.xlu0 %649
  %vm651 = vcmask 130048
  %s652 = scalar_lea.vmem %s1, 772
  %653 = vst.msk [vmem:[%s652] ss:$8 sm:$0xf] %vm651, %v650
  %s654 = scalar_lea.vmem %s1, 772
  %655 = vst.msk [vmem:[%s654] ss:$8 sm:$0xf0] %vm651, %v650
  %s656 = scalar_lea.vmem %s0, 104
  %v657 = vld [vmem:[%s656] sm:$0xff]
  %658 = vrot.lane.b32.xlu0 %v657, 64
  %v659 = vpop.permute.xlu0 %658
  %vm660 = vcmask 130048
  %s661 = scalar_lea.vmem %s1, 836
  %662 = vst.msk [vmem:[%s661] ss:$8 sm:$0xf] %vm660, %v659
  %s663 = scalar_lea.vmem %s1, 836
  %664 = vst.msk [vmem:[%s663] ss:$8 sm:$0xf0] %vm660, %v659
  %s665 = scalar_lea.vmem %s0, 112
  %v666 = vld [vmem:[%s665] sm:$0xff]
  %667 = vrot.lane.b32.xlu0 %v666, 64
  %v668 = vpop.permute.xlu0 %667
  %vm669 = vcmask 130048
  %s670 = scalar_lea.vmem %s1, 900
  %671 = vst.msk [vmem:[%s670] ss:$8 sm:$0xf] %vm669, %v668
  %s672 = scalar_lea.vmem %s1, 900
  %673 = vst.msk [vmem:[%s672] ss:$8 sm:$0xf0] %vm669, %v668
  %s674 = scalar_lea.vmem %s0, 120
  %v675 = vld [vmem:[%s674] sm:$0xff]
  %676 = vrot.lane.b32.xlu0 %v675, 64
  %v677 = vpop.permute.xlu0 %676
  %vm678 = vcmask 130048
  %s679 = scalar_lea.vmem %s1, 964
  %680 = vst.msk [vmem:[%s679] ss:$8 sm:$0xf] %vm678, %v677
  %s681 = scalar_lea.vmem %s1, 964
  %682 = vst.msk [vmem:[%s681] ss:$8 sm:$0xf0] %vm678, %v677
  %v683 = vld [vmem:[%s0] sm:$0xff]
  %684 = vrot.lane.b32.xlu0 %v683, 48
  %v685 = vpop.permute.xlu0 %684
  %vm686 = vcmask 130048
  %s687 = scalar_lea.vmem %s1, 5
  %688 = vst.msk [vmem:[%s687] ss:$8 sm:$0xf] %vm686, %v685
  %s689 = scalar_lea.vmem %s1, 5
  %690 = vst.msk [vmem:[%s689] ss:$8 sm:$0xf0] %vm686, %v685
  %s691 = scalar_lea.vmem %s0, 8
  %v692 = vld [vmem:[%s691] sm:$0xff]
  %693 = vrot.lane.b32.xlu0 %v692, 48
  %v694 = vpop.permute.xlu0 %693
  %vm695 = vcmask 130048
  %s696 = scalar_lea.vmem %s1, 69
  %697 = vst.msk [vmem:[%s696] ss:$8 sm:$0xf] %vm695, %v694
  %s698 = scalar_lea.vmem %s1, 69
  %699 = vst.msk [vmem:[%s698] ss:$8 sm:$0xf0] %vm695, %v694
  %s700 = scalar_lea.vmem %s0, 16
  %v701 = vld [vmem:[%s700] sm:$0xff]
  %702 = vrot.lane.b32.xlu0 %v701, 48
  %v703 = vpop.permute.xlu0 %702
  %vm704 = vcmask 130048
  %s705 = scalar_lea.vmem %s1, 133
  %706 = vst.msk [vmem:[%s705] ss:$8 sm:$0xf] %vm704, %v703
  %s707 = scalar_lea.vmem %s1, 133
  %708 = vst.msk [vmem:[%s707] ss:$8 sm:$0xf0] %vm704, %v703
  %s709 = scalar_lea.vmem %s0, 24
  %v710 = vld [vmem:[%s709] sm:$0xff]
  %711 = vrot.lane.b32.xlu0 %v710, 48
  %v712 = vpop.permute.xlu0 %711
  %vm713 = vcmask 130048
  %s714 = scalar_lea.vmem %s1, 197
  %715 = vst.msk [vmem:[%s714] ss:$8 sm:$0xf] %vm713, %v712
  %s716 = scalar_lea.vmem %s1, 197
  %717 = vst.msk [vmem:[%s716] ss:$8 sm:$0xf0] %vm713, %v712
  %s718 = scalar_lea.vmem %s0, 32
  %v719 = vld [vmem:[%s718] sm:$0xff]
  %720 = vrot.lane.b32.xlu0 %v719, 48
  %v721 = vpop.permute.xlu0 %720
  %vm722 = vcmask 130048
  %s723 = scalar_lea.vmem %s1, 261
  %724 = vst.msk [vmem:[%s723] ss:$8 sm:$0xf] %vm722, %v721
  %s725 = scalar_lea.vmem %s1, 261
  %726 = vst.msk [vmem:[%s725] ss:$8 sm:$0xf0] %vm722, %v721
  %s727 = scalar_lea.vmem %s0, 40
  %v728 = vld [vmem:[%s727] sm:$0xff]
  %729 = vrot.lane.b32.xlu0 %v728, 48
  %v730 = vpop.permute.xlu0 %729
  %vm731 = vcmask 130048
  %s732 = scalar_lea.vmem %s1, 325
  %733 = vst.msk [vmem:[%s732] ss:$8 sm:$0xf] %vm731, %v730
  %s734 = scalar_lea.vmem %s1, 325
  %735 = vst.msk [vmem:[%s734] ss:$8 sm:$0xf0] %vm731, %v730
  %s736 = scalar_lea.vmem %s0, 48
  %v737 = vld [vmem:[%s736] sm:$0xff]
  %738 = vrot.lane.b32.xlu0 %v737, 48
  %v739 = vpop.permute.xlu0 %738
  %vm740 = vcmask 130048
  %s741 = scalar_lea.vmem %s1, 389
  %742 = vst.msk [vmem:[%s741] ss:$8 sm:$0xf] %vm740, %v739
  %s743 = scalar_lea.vmem %s1, 389
  %744 = vst.msk [vmem:[%s743] ss:$8 sm:$0xf0] %vm740, %v739
  %s745 = scalar_lea.vmem %s0, 56
  %v746 = vld [vmem:[%s745] sm:$0xff]
  %747 = vrot.lane.b32.xlu0 %v746, 48
  %v748 = vpop.permute.xlu0 %747
  %vm749 = vcmask 130048
  %s750 = scalar_lea.vmem %s1, 453
  %751 = vst.msk [vmem:[%s750] ss:$8 sm:$0xf] %vm749, %v748
  %s752 = scalar_lea.vmem %s1, 453
  %753 = vst.msk [vmem:[%s752] ss:$8 sm:$0xf0] %vm749, %v748
  %s754 = scalar_lea.vmem %s0, 64
  %v755 = vld [vmem:[%s754] sm:$0xff]
  %756 = vrot.lane.b32.xlu0 %v755, 48
  %v757 = vpop.permute.xlu0 %756
  %vm758 = vcmask 130048
  %s759 = scalar_lea.vmem %s1, 517
  %760 = vst.msk [vmem:[%s759] ss:$8 sm:$0xf] %vm758, %v757
  %s761 = scalar_lea.vmem %s1, 517
  %762 = vst.msk [vmem:[%s761] ss:$8 sm:$0xf0] %vm758, %v757
  %s763 = scalar_lea.vmem %s0, 72
  %v764 = vld [vmem:[%s763] sm:$0xff]
  %765 = vrot.lane.b32.xlu0 %v764, 48
  %v766 = vpop.permute.xlu0 %765
  %vm767 = vcmask 130048
  %s768 = scalar_lea.vmem %s1, 581
  %769 = vst.msk [vmem:[%s768] ss:$8 sm:$0xf] %vm767, %v766
  %s770 = scalar_lea.vmem %s1, 581
  %771 = vst.msk [vmem:[%s770] ss:$8 sm:$0xf0] %vm767, %v766
  %s772 = scalar_lea.vmem %s0, 80
  %v773 = vld [vmem:[%s772] sm:$0xff]
  %774 = vrot.lane.b32.xlu0 %v773, 48
  %v775 = vpop.permute.xlu0 %774
  %vm776 = vcmask 130048
  %s777 = scalar_lea.vmem %s1, 645
  %778 = vst.msk [vmem:[%s777] ss:$8 sm:$0xf] %vm776, %v775
  %s779 = scalar_lea.vmem %s1, 645
  %780 = vst.msk [vmem:[%s779] ss:$8 sm:$0xf0] %vm776, %v775
  %s781 = scalar_lea.vmem %s0, 88
  %v782 = vld [vmem:[%s781] sm:$0xff]
  %783 = vrot.lane.b32.xlu0 %v782, 48
  %v784 = vpop.permute.xlu0 %783
  %vm785 = vcmask 130048
  %s786 = scalar_lea.vmem %s1, 709
  %787 = vst.msk [vmem:[%s786] ss:$8 sm:$0xf] %vm785, %v784
  %s788 = scalar_lea.vmem %s1, 709
  %789 = vst.msk [vmem:[%s788] ss:$8 sm:$0xf0] %vm785, %v784
  %s790 = scalar_lea.vmem %s0, 96
  %v791 = vld [vmem:[%s790] sm:$0xff]
  %792 = vrot.lane.b32.xlu0 %v791, 48
  %v793 = vpop.permute.xlu0 %792
  %vm794 = vcmask 130048
  %s795 = scalar_lea.vmem %s1, 773
  %796 = vst.msk [vmem:[%s795] ss:$8 sm:$0xf] %vm794, %v793
  %s797 = scalar_lea.vmem %s1, 773
  %798 = vst.msk [vmem:[%s797] ss:$8 sm:$0xf0] %vm794, %v793
  %s799 = scalar_lea.vmem %s0, 104
  %v800 = vld [vmem:[%s799] sm:$0xff]
  %801 = vrot.lane.b32.xlu0 %v800, 48
  %v802 = vpop.permute.xlu0 %801
  %vm803 = vcmask 130048
  %s804 = scalar_lea.vmem %s1, 837
  %805 = vst.msk [vmem:[%s804] ss:$8 sm:$0xf] %vm803, %v802
  %s806 = scalar_lea.vmem %s1, 837
  %807 = vst.msk [vmem:[%s806] ss:$8 sm:$0xf0] %vm803, %v802
  %s808 = scalar_lea.vmem %s0, 112
  %v809 = vld [vmem:[%s808] sm:$0xff]
  %810 = vrot.lane.b32.xlu0 %v809, 48
  %v811 = vpop.permute.xlu0 %810
  %vm812 = vcmask 130048
  %s813 = scalar_lea.vmem %s1, 901
  %814 = vst.msk [vmem:[%s813] ss:$8 sm:$0xf] %vm812, %v811
  %s815 = scalar_lea.vmem %s1, 901
  %816 = vst.msk [vmem:[%s815] ss:$8 sm:$0xf0] %vm812, %v811
  %s817 = scalar_lea.vmem %s0, 120
  %v818 = vld [vmem:[%s817] sm:$0xff]
  %819 = vrot.lane.b32.xlu0 %v818, 48
  %v820 = vpop.permute.xlu0 %819
  %vm821 = vcmask 130048
  %s822 = scalar_lea.vmem %s1, 965
  %823 = vst.msk [vmem:[%s822] ss:$8 sm:$0xf] %vm821, %v820
  %s824 = scalar_lea.vmem %s1, 965
  %825 = vst.msk [vmem:[%s824] ss:$8 sm:$0xf0] %vm821, %v820
  %v826 = vld [vmem:[%s0] sm:$0xff]
  %827 = vrot.lane.b32.xlu0 %v826, 32
  %v828 = vpop.permute.xlu0 %827
  %vm829 = vcmask 130048
  %s830 = scalar_lea.vmem %s1, 6
  %831 = vst.msk [vmem:[%s830] ss:$8 sm:$0xf] %vm829, %v828
  %s832 = scalar_lea.vmem %s1, 6
  %833 = vst.msk [vmem:[%s832] ss:$8 sm:$0xf0] %vm829, %v828
  %s834 = scalar_lea.vmem %s0, 8
  %v835 = vld [vmem:[%s834] sm:$0xff]
  %836 = vrot.lane.b32.xlu0 %v835, 32
  %v837 = vpop.permute.xlu0 %836
  %vm838 = vcmask 130048
  %s839 = scalar_lea.vmem %s1, 70
  %840 = vst.msk [vmem:[%s839] ss:$8 sm:$0xf] %vm838, %v837
  %s841 = scalar_lea.vmem %s1, 70
  %842 = vst.msk [vmem:[%s841] ss:$8 sm:$0xf0] %vm838, %v837
  %s843 = scalar_lea.vmem %s0, 16
  %v844 = vld [vmem:[%s843] sm:$0xff]
  %845 = vrot.lane.b32.xlu0 %v844, 32
  %v846 = vpop.permute.xlu0 %845
  %vm847 = vcmask 130048
  %s848 = scalar_lea.vmem %s1, 134
  %849 = vst.msk [vmem:[%s848] ss:$8 sm:$0xf] %vm847, %v846
  %s850 = scalar_lea.vmem %s1, 134
  %851 = vst.msk [vmem:[%s850] ss:$8 sm:$0xf0] %vm847, %v846
  %s852 = scalar_lea.vmem %s0, 24
  %v853 = vld [vmem:[%s852] sm:$0xff]
  %854 = vrot.lane.b32.xlu0 %v853, 32
  %v855 = vpop.permute.xlu0 %854
  %vm856 = vcmask 130048
  %s857 = scalar_lea.vmem %s1, 198
  %858 = vst.msk [vmem:[%s857] ss:$8 sm:$0xf] %vm856, %v855
  %s859 = scalar_lea.vmem %s1, 198
  %860 = vst.msk [vmem:[%s859] ss:$8 sm:$0xf0] %vm856, %v855
  %s861 = scalar_lea.vmem %s0, 32
  %v862 = vld [vmem:[%s861] sm:$0xff]
  %863 = vrot.lane.b32.xlu0 %v862, 32
  %v864 = vpop.permute.xlu0 %863
  %vm865 = vcmask 130048
  %s866 = scalar_lea.vmem %s1, 262
  %867 = vst.msk [vmem:[%s866] ss:$8 sm:$0xf] %vm865, %v864
  %s868 = scalar_lea.vmem %s1, 262
  %869 = vst.msk [vmem:[%s868] ss:$8 sm:$0xf0] %vm865, %v864
  %s870 = scalar_lea.vmem %s0, 40
  %v871 = vld [vmem:[%s870] sm:$0xff]
  %872 = vrot.lane.b32.xlu0 %v871, 32
  %v873 = vpop.permute.xlu0 %872
  %vm874 = vcmask 130048
  %s875 = scalar_lea.vmem %s1, 326
  %876 = vst.msk [vmem:[%s875] ss:$8 sm:$0xf] %vm874, %v873
  %s877 = scalar_lea.vmem %s1, 326
  %878 = vst.msk [vmem:[%s877] ss:$8 sm:$0xf0] %vm874, %v873
  %s879 = scalar_lea.vmem %s0, 48
  %v880 = vld [vmem:[%s879] sm:$0xff]
  %881 = vrot.lane.b32.xlu0 %v880, 32
  %v882 = vpop.permute.xlu0 %881
  %vm883 = vcmask 130048
  %s884 = scalar_lea.vmem %s1, 390
  %885 = vst.msk [vmem:[%s884] ss:$8 sm:$0xf] %vm883, %v882
  %s886 = scalar_lea.vmem %s1, 390
  %887 = vst.msk [vmem:[%s886] ss:$8 sm:$0xf0] %vm883, %v882
  %s888 = scalar_lea.vmem %s0, 56
  %v889 = vld [vmem:[%s888] sm:$0xff]
  %890 = vrot.lane.b32.xlu0 %v889, 32
  %v891 = vpop.permute.xlu0 %890
  %vm892 = vcmask 130048
  %s893 = scalar_lea.vmem %s1, 454
  %894 = vst.msk [vmem:[%s893] ss:$8 sm:$0xf] %vm892, %v891
  %s895 = scalar_lea.vmem %s1, 454
  %896 = vst.msk [vmem:[%s895] ss:$8 sm:$0xf0] %vm892, %v891
  %s897 = scalar_lea.vmem %s0, 64
  %v898 = vld [vmem:[%s897] sm:$0xff]
  %899 = vrot.lane.b32.xlu0 %v898, 32
  %v900 = vpop.permute.xlu0 %899
  %vm901 = vcmask 130048
  %s902 = scalar_lea.vmem %s1, 518
  %903 = vst.msk [vmem:[%s902] ss:$8 sm:$0xf] %vm901, %v900
  %s904 = scalar_lea.vmem %s1, 518
  %905 = vst.msk [vmem:[%s904] ss:$8 sm:$0xf0] %vm901, %v900
  %s906 = scalar_lea.vmem %s0, 72
  %v907 = vld [vmem:[%s906] sm:$0xff]
  %908 = vrot.lane.b32.xlu0 %v907, 32
  %v909 = vpop.permute.xlu0 %908
  %vm910 = vcmask 130048
  %s911 = scalar_lea.vmem %s1, 582
  %912 = vst.msk [vmem:[%s911] ss:$8 sm:$0xf] %vm910, %v909
  %s913 = scalar_lea.vmem %s1, 582
  %914 = vst.msk [vmem:[%s913] ss:$8 sm:$0xf0] %vm910, %v909
  %s915 = scalar_lea.vmem %s0, 80
  %v916 = vld [vmem:[%s915] sm:$0xff]
  %917 = vrot.lane.b32.xlu0 %v916, 32
  %v918 = vpop.permute.xlu0 %917
  %vm919 = vcmask 130048
  %s920 = scalar_lea.vmem %s1, 646
  %921 = vst.msk [vmem:[%s920] ss:$8 sm:$0xf] %vm919, %v918
  %s922 = scalar_lea.vmem %s1, 646
  %923 = vst.msk [vmem:[%s922] ss:$8 sm:$0xf0] %vm919, %v918
  %s924 = scalar_lea.vmem %s0, 88
  %v925 = vld [vmem:[%s924] sm:$0xff]
  %926 = vrot.lane.b32.xlu0 %v925, 32
  %v927 = vpop.permute.xlu0 %926
  %vm928 = vcmask 130048
  %s929 = scalar_lea.vmem %s1, 710
  %930 = vst.msk [vmem:[%s929] ss:$8 sm:$0xf] %vm928, %v927
  %s931 = scalar_lea.vmem %s1, 710
  %932 = vst.msk [vmem:[%s931] ss:$8 sm:$0xf0] %vm928, %v927
  %s933 = scalar_lea.vmem %s0, 96
  %v934 = vld [vmem:[%s933] sm:$0xff]
  %935 = vrot.lane.b32.xlu0 %v934, 32
  %v936 = vpop.permute.xlu0 %935
  %vm937 = vcmask 130048
  %s938 = scalar_lea.vmem %s1, 774
  %939 = vst.msk [vmem:[%s938] ss:$8 sm:$0xf] %vm937, %v936
  %s940 = scalar_lea.vmem %s1, 774
  %941 = vst.msk [vmem:[%s940] ss:$8 sm:$0xf0] %vm937, %v936
  %s942 = scalar_lea.vmem %s0, 104
  %v943 = vld [vmem:[%s942] sm:$0xff]
  %944 = vrot.lane.b32.xlu0 %v943, 32
  %v945 = vpop.permute.xlu0 %944
  %vm946 = vcmask 130048
  %s947 = scalar_lea.vmem %s1, 838
  %948 = vst.msk [vmem:[%s947] ss:$8 sm:$0xf] %vm946, %v945
  %s949 = scalar_lea.vmem %s1, 838
  %950 = vst.msk [vmem:[%s949] ss:$8 sm:$0xf0] %vm946, %v945
  %s951 = scalar_lea.vmem %s0, 112
  %v952 = vld [vmem:[%s951] sm:$0xff]
  %953 = vrot.lane.b32.xlu0 %v952, 32
  %v954 = vpop.permute.xlu0 %953
  %vm955 = vcmask 130048
  %s956 = scalar_lea.vmem %s1, 902
  %957 = vst.msk [vmem:[%s956] ss:$8 sm:$0xf] %vm955, %v954
  %s958 = scalar_lea.vmem %s1, 902
  %959 = vst.msk [vmem:[%s958] ss:$8 sm:$0xf0] %vm955, %v954
  %s960 = scalar_lea.vmem %s0, 120
  %v961 = vld [vmem:[%s960] sm:$0xff]
  %962 = vrot.lane.b32.xlu0 %v961, 32
  %v963 = vpop.permute.xlu0 %962
  %vm964 = vcmask 130048
  %s965 = scalar_lea.vmem %s1, 966
  %966 = vst.msk [vmem:[%s965] ss:$8 sm:$0xf] %vm964, %v963
  %s967 = scalar_lea.vmem %s1, 966
  %968 = vst.msk [vmem:[%s967] ss:$8 sm:$0xf0] %vm964, %v963
  %v969 = vld [vmem:[%s0] sm:$0xff]
  %970 = vrot.lane.b32.xlu0 %v969, 16
  %v971 = vpop.permute.xlu0 %970
  %vm972 = vcmask 130048
  %s973 = scalar_lea.vmem %s1, 7
  %974 = vst.msk [vmem:[%s973] ss:$8 sm:$0xf] %vm972, %v971
  %s975 = scalar_lea.vmem %s1, 7
  %976 = vst.msk [vmem:[%s975] ss:$8 sm:$0xf0] %vm972, %v971
  %s977 = scalar_lea.vmem %s0, 8
  %v978 = vld [vmem:[%s977] sm:$0xff]
  %979 = vrot.lane.b32.xlu0 %v978, 16
  %v980 = vpop.permute.xlu0 %979
  %vm981 = vcmask 130048
  %s982 = scalar_lea.vmem %s1, 71
  %983 = vst.msk [vmem:[%s982] ss:$8 sm:$0xf] %vm981, %v980
  %s984 = scalar_lea.vmem %s1, 71
  %985 = vst.msk [vmem:[%s984] ss:$8 sm:$0xf0] %vm981, %v980
  %s986 = scalar_lea.vmem %s0, 16
  %v987 = vld [vmem:[%s986] sm:$0xff]
  %988 = vrot.lane.b32.xlu0 %v987, 16
  %v989 = vpop.permute.xlu0 %988
  %vm990 = vcmask 130048
  %s991 = scalar_lea.vmem %s1, 135
  %992 = vst.msk [vmem:[%s991] ss:$8 sm:$0xf] %vm990, %v989
  %s993 = scalar_lea.vmem %s1, 135
  %994 = vst.msk [vmem:[%s993] ss:$8 sm:$0xf0] %vm990, %v989
  %s995 = scalar_lea.vmem %s0, 24
  %v996 = vld [vmem:[%s995] sm:$0xff]
  %997 = vrot.lane.b32.xlu0 %v996, 16
  %v998 = vpop.permute.xlu0 %997
  %vm999 = vcmask 130048
  %s1000 = scalar_lea.vmem %s1, 199
  %1001 = vst.msk [vmem:[%s1000] ss:$8 sm:$0xf] %vm999, %v998
  %s1002 = scalar_lea.vmem %s1, 199
  %1003 = vst.msk [vmem:[%s1002] ss:$8 sm:$0xf0] %vm999, %v998
  %s1004 = scalar_lea.vmem %s0, 32
  %v1005 = vld [vmem:[%s1004] sm:$0xff]
  %1006 = vrot.lane.b32.xlu0 %v1005, 16
  %v1007 = vpop.permute.xlu0 %1006
  %vm1008 = vcmask 130048
  %s1009 = scalar_lea.vmem %s1, 263
  %1010 = vst.msk [vmem:[%s1009] ss:$8 sm:$0xf] %vm1008, %v1007
  %s1011 = scalar_lea.vmem %s1, 263
  %1012 = vst.msk [vmem:[%s1011] ss:$8 sm:$0xf0] %vm1008, %v1007
  %s1013 = scalar_lea.vmem %s0, 40
  %v1014 = vld [vmem:[%s1013] sm:$0xff]
  %1015 = vrot.lane.b32.xlu0 %v1014, 16
  %v1016 = vpop.permute.xlu0 %1015
  %vm1017 = vcmask 130048
  %s1018 = scalar_lea.vmem %s1, 327
  %1019 = vst.msk [vmem:[%s1018] ss:$8 sm:$0xf] %vm1017, %v1016
  %s1020 = scalar_lea.vmem %s1, 327
  %1021 = vst.msk [vmem:[%s1020] ss:$8 sm:$0xf0] %vm1017, %v1016
  %s1022 = scalar_lea.vmem %s0, 48
  %v1023 = vld [vmem:[%s1022] sm:$0xff]
  %1024 = vrot.lane.b32.xlu0 %v1023, 16
  %v1025 = vpop.permute.xlu0 %1024
  %vm1026 = vcmask 130048
  %s1027 = scalar_lea.vmem %s1, 391
  %1028 = vst.msk [vmem:[%s1027] ss:$8 sm:$0xf] %vm1026, %v1025
  %s1029 = scalar_lea.vmem %s1, 391
  %1030 = vst.msk [vmem:[%s1029] ss:$8 sm:$0xf0] %vm1026, %v1025
  %s1031 = scalar_lea.vmem %s0, 56
  %v1032 = vld [vmem:[%s1031] sm:$0xff]
  %1033 = vrot.lane.b32.xlu0 %v1032, 16
  %v1034 = vpop.permute.xlu0 %1033
  %vm1035 = vcmask 130048
  %s1036 = scalar_lea.vmem %s1, 455
  %1037 = vst.msk [vmem:[%s1036] ss:$8 sm:$0xf] %vm1035, %v1034
  %s1038 = scalar_lea.vmem %s1, 455
  %1039 = vst.msk [vmem:[%s1038] ss:$8 sm:$0xf0] %vm1035, %v1034
  %s1040 = scalar_lea.vmem %s0, 64
  %v1041 = vld [vmem:[%s1040] sm:$0xff]
  %1042 = vrot.lane.b32.xlu0 %v1041, 16
  %v1043 = vpop.permute.xlu0 %1042
  %vm1044 = vcmask 130048
  %s1045 = scalar_lea.vmem %s1, 519
  %1046 = vst.msk [vmem:[%s1045] ss:$8 sm:$0xf] %vm1044, %v1043
  %s1047 = scalar_lea.vmem %s1, 519
  %1048 = vst.msk [vmem:[%s1047] ss:$8 sm:$0xf0] %vm1044, %v1043
  %s1049 = scalar_lea.vmem %s0, 72
  %v1050 = vld [vmem:[%s1049] sm:$0xff]
  %1051 = vrot.lane.b32.xlu0 %v1050, 16
  %v1052 = vpop.permute.xlu0 %1051
  %vm1053 = vcmask 130048
  %s1054 = scalar_lea.vmem %s1, 583
  %1055 = vst.msk [vmem:[%s1054] ss:$8 sm:$0xf] %vm1053, %v1052
  %s1056 = scalar_lea.vmem %s1, 583
  %1057 = vst.msk [vmem:[%s1056] ss:$8 sm:$0xf0] %vm1053, %v1052
  %s1058 = scalar_lea.vmem %s0, 80
  %v1059 = vld [vmem:[%s1058] sm:$0xff]
  %1060 = vrot.lane.b32.xlu0 %v1059, 16
  %v1061 = vpop.permute.xlu0 %1060
  %vm1062 = vcmask 130048
  %s1063 = scalar_lea.vmem %s1, 647
  %1064 = vst.msk [vmem:[%s1063] ss:$8 sm:$0xf] %vm1062, %v1061
  %s1065 = scalar_lea.vmem %s1, 647
  %1066 = vst.msk [vmem:[%s1065] ss:$8 sm:$0xf0] %vm1062, %v1061
  %s1067 = scalar_lea.vmem %s0, 88
  %v1068 = vld [vmem:[%s1067] sm:$0xff]
  %1069 = vrot.lane.b32.xlu0 %v1068, 16
  %v1070 = vpop.permute.xlu0 %1069
  %vm1071 = vcmask 130048
  %s1072 = scalar_lea.vmem %s1, 711
  %1073 = vst.msk [vmem:[%s1072] ss:$8 sm:$0xf] %vm1071, %v1070
  %s1074 = scalar_lea.vmem %s1, 711
  %1075 = vst.msk [vmem:[%s1074] ss:$8 sm:$0xf0] %vm1071, %v1070
  %s1076 = scalar_lea.vmem %s0, 96
  %v1077 = vld [vmem:[%s1076] sm:$0xff]
  %1078 = vrot.lane.b32.xlu0 %v1077, 16
  %v1079 = vpop.permute.xlu0 %1078
  %vm1080 = vcmask 130048
  %s1081 = scalar_lea.vmem %s1, 775
  %1082 = vst.msk [vmem:[%s1081] ss:$8 sm:$0xf] %vm1080, %v1079
  %s1083 = scalar_lea.vmem %s1, 775
  %1084 = vst.msk [vmem:[%s1083] ss:$8 sm:$0xf0] %vm1080, %v1079
  %s1085 = scalar_lea.vmem %s0, 104
  %v1086 = vld [vmem:[%s1085] sm:$0xff]
  %1087 = vrot.lane.b32.xlu0 %v1086, 16
  %v1088 = vpop.permute.xlu0 %1087
  %vm1089 = vcmask 130048
  %s1090 = scalar_lea.vmem %s1, 839
  %1091 = vst.msk [vmem:[%s1090] ss:$8 sm:$0xf] %vm1089, %v1088
  %s1092 = scalar_lea.vmem %s1, 839
  %1093 = vst.msk [vmem:[%s1092] ss:$8 sm:$0xf0] %vm1089, %v1088
  %s1094 = scalar_lea.vmem %s0, 112
  %v1095 = vld [vmem:[%s1094] sm:$0xff]
  %1096 = vrot.lane.b32.xlu0 %v1095, 16
  %v1097 = vpop.permute.xlu0 %1096
  %vm1098 = vcmask 130048
  %s1099 = scalar_lea.vmem %s1, 903
  %1100 = vst.msk [vmem:[%s1099] ss:$8 sm:$0xf] %vm1098, %v1097
  %s1101 = scalar_lea.vmem %s1, 903
  %1102 = vst.msk [vmem:[%s1101] ss:$8 sm:$0xf0] %vm1098, %v1097
  %s1103 = scalar_lea.vmem %s0, 120
  %v1104 = vld [vmem:[%s1103] sm:$0xff]
  %1105 = vrot.lane.b32.xlu0 %v1104, 16
  %v1106 = vpop.permute.xlu0 %1105
  %vm1107 = vcmask 130048
  %s1108 = scalar_lea.vmem %s1, 967
  %1109 = vst.msk [vmem:[%s1108] ss:$8 sm:$0xf] %vm1107, %v1106
  %s1110 = scalar_lea.vmem %s1, 967
  %1111 = vst.msk [vmem:[%s1110] ss:$8 sm:$0xf0] %vm1107, %v1106

// kernel: custom-call.4
$region0: #{custom-call.4}
  %s0 = inlined_call_operand.vmem [shape: f32[16,16], index: 0, kind: input, shape index: {}]
  %s1 = inlined_call_operand.vmem [shape: f32[16,16], index: 1, kind: output, shape index: {}]
  $region1: #{custom-call.4} parent=0
    #allocation0 [shape = 'u8[8192]{0}', space=vmem, size = 0x2000, scoped, tag = 'operand span for operand 0']
    #allocation1 [shape = 'u8[8192]{0}', space=vmem, size = 0x2000, scoped, tag = 'operand span for operand 1']
    // Predicated region
    $region2: #{custom-call.4} parent=1 // pred_check
      _
    $region3: #{custom-call.4} parent=1 // pred_check_branch
      %3 = sbr.rel (0) target = $region5
    $region4: #{custom-call.4} parent=1 // pred_region
      // Predicated region
      $region6: #{custom-call.4} parent=4 // pred_check
        _
      $region7: #{custom-call.4} parent=4 // pred_check_branch
        %5 = sbr.rel (0) target = $region9
      $region8: #{custom-call.4} parent=4 // pred_region
        // Predicated region
        $region21: #{custom-call.4} parent=8 // pred_check
          _
        $region22: #{custom-call.4} parent=8 // pred_check_branch
          %22 = sbr.rel (0) target = $region24
        $region23: #{custom-call.4} parent=8 // pred_region
          loop: start=0, step=1, limit=1
          $region25: #{custom-call.4} parent=23 // loop_pre_header
            _
          $region26: #{custom-call.4} parent=23 // loop_header
            %s24 = sphi 0, %s28
            %p25 = scmp.ge.s32.totalorder %s24, 1
            %s29 = sphi %s0, %s0
            %s30 = sphi [#allocation0], [#allocation0]
          $region27: #{custom-call.4} parent=23 // loop_header_branch
            %27 = sbr.rel (%p25) target = $region31
          $region28: #{custom-call.4} parent=23 // loop_body
            %v31 = vld [vmem:[%s29] sm:$0xff]
            %32 = vst [vmem:[%s30] sm:$0xff] %v31
            %v33 = vld [vmem:[%s29 + $0x8] sm:$0xff]
            %34 = vst [vmem:[%s30 + $0x8] sm:$0xff] %v33
          $region29: #{custom-call.4} parent=23 // loop_footer
            %s28 = sadd.s32 1, %s24
          $region30: #{custom-call.4} parent=23 // loop_footer_branch
            %23 = sbr.rel target = $region26
          $region31: #{custom-call.4} parent=23 // loop_exit
            _
        $region24: #{custom-call.4} parent=8 // pred_fallthru
          _
        // Predicated region
        $region32: #{custom-call.4} parent=8 // pred_check
          _
        $region33: #{custom-call.4} parent=8 // pred_check_branch
          %36 = sbr.rel target = $region35
        $region34: #{custom-call.4} parent=8 // pred_region
          _
        $region35: #{custom-call.4} parent=8 // pred_fallthru
          _
      $region9: #{custom-call.4} parent=4 // pred_fallthru
        _
      // Predicated region
      $region10: #{custom-call.4} parent=4 // pred_check
        _
      $region11: #{custom-call.4} parent=4 // pred_check_branch
        %7 = sbr.rel target = $region13
      $region12: #{custom-call.4} parent=4 // pred_region
        loop: start=0, step=1, limit=1
        $region14: #{custom-call.4} parent=12 // loop_pre_header
          _
        $region15: #{custom-call.4} parent=12 // loop_header
          %s10 = sphi 0, %s14
          %p11 = scmp.ge.s32.totalorder %s10, 1
          %s15 = sphi %s0, %s0
          %s16 = sphi [#allocation0], [#allocation0]
        $region16: #{custom-call.4} parent=12 // loop_header_branch
          %13 = sbr.rel (%p11) target = $region20
        $region17: #{custom-call.4} parent=12 // loop_body
          %v17 = vld [vmem:[%s15] sm:$0xff]
          %18 = vst [vmem:[%s16] sm:$0xff] %v17
          %v19 = vld [vmem:[%s15 + $0x8] sm:$0xff]
          %20 = vst [vmem:[%s16 + $0x8] sm:$0xff] %v19
        $region18: #{custom-call.4} parent=12 // loop_footer
          %s14 = sadd.s32 1, %s10
        $region19: #{custom-call.4} parent=12 // loop_footer_branch
          %9 = sbr.rel target = $region15
        $region20: #{custom-call.4} parent=12 // loop_exit
          _
      $region13: #{custom-call.4} parent=4 // pred_fallthru
        _
    $region5: #{custom-call.4} parent=1 // pred_fallthru
      _
    %37 = vnop
    %38 = vst [vmem:[#allocation1] sm:$0xff] 0.0
    %s39 = scalar_lea.vmem [#allocation1], 8
    %40 = vst [vmem:[%s39] sm:$0xff] 0.0
    %vm41 = vcmask 7168
    %v42 = vld [vmem:[#allocation1] ss:$0 sm:$0xff]
    %v43 = vld [vmem:[#allocation0] ss:$0 sm:$0xff]
    %v44 = vmul.f32 %v42, %v42
    %45 = vadd.xlane.f32.xlu0 %v44
    %v46 = vpop.xlane.xlu0 %45
    %v47 = vsub.f32 %v43, %v46
    %v48 = vrsqrt.pop %v47
    %v49 = vld [vmem:[#allocation0] sm:$0xff]
    %v50 = vld [vmem:[#allocation1] sm:$0xff]
    %v51 = vmul.f32 %v50, %v42
    %52 = vadd.xlane.f32.xlu0 %v51
    %v53 = vpop.xlane.xlu0 %52
    %v54 = vsub.f32 %v49, %v53
    %v55 = vmul.f32 %v54, %v48
    %v56 = vsel %vm41, %v55, 0.0
    %v57 = vadd.f32 %v50, %v56
    %58 = vst [vmem:[#allocation1] sm:$0xff] %v57
    %s59 = scalar_lea.vmem [#allocation0], 8
    %v60 = vld [vmem:[%s59] sm:$0xff]
    %s61 = scalar_lea.vmem [#allocation1], 8
    %v62 = vld [vmem:[%s61] sm:$0xff]
    %v63 = vmul.f32 %v62, %v42
    %64 = vadd.xlane.f32.xlu0 %v63
    %v65 = vpop.xlane.xlu0 %64
    %v66 = vsub.f32 %v60, %v65
    %v67 = vmul.f32 %v66, %v48
    %v68 = vsel %vm41, %v67, 0.0
    %v69 = vadd.f32 %v62, %v68
    %s70 = scalar_lea.vmem [#allocation1], 8
    %71 = vst [vmem:[%s70] sm:$0xff] %v69
    %vm72 = vcmask 15368
    %s73 = scalar_lea.vmem [#allocation1], 1
    %v74 = vld [vmem:[%s73] ss:$0 sm:$0xff]
    %s75 = scalar_lea.vmem [#allocation0], 1
    %v76 = vld [vmem:[%s75] ss:$0 sm:$0xff]
    %v77 = vmul.f32 %v74, %v74
    %78 = vadd.xlane.f32.xlu0 %v77
    %v79 = vpop.xlane.xlu0 %78
    %v80 = vsub.f32 %v76, %v79
    %v81 = vrsqrt.pop %v80
    %v82 = vld [vmem:[#allocation0] sm:$0xff]
    %v83 = vld [vmem:[#allocation1] sm:$0xff]
    %v84 = vmul.f32 %v83, %v74
    %85 = vadd.xlane.f32.xlu0 %v84
    %v86 = vpop.xlane.xlu0 %85
    %v87 = vsub.f32 %v82, %v86
    %v88 = vmul.f32 %v87, %v81
    %vm89 = vcmask 1047553
    %vm90 = vmand %vm72, %vm89
    %v91 = vsel %vm90, %v88, 0.0
    %v92 = vadd.f32 %v83, %v91
    %93 = vst [vmem:[#allocation1] sm:$0xff] %v92
    %s94 = scalar_lea.vmem [#allocation0], 8
    %v95 = vld [vmem:[%s94] sm:$0xff]
    %s96 = scalar_lea.vmem [#allocation1], 8
    %v97 = vld [vmem:[%s96] sm:$0xff]
    %v98 = vmul.f32 %v97, %v74
    %99 = vadd.xlane.f32.xlu0 %v98
    %v100 = vpop.xlane.xlu0 %99
    %v101 = vsub.f32 %v95, %v100
    %v102 = vmul.f32 %v101, %v81
    %v103 = vsel %vm72, %v102, 0.0
    %v104 = vadd.f32 %v97, %v103
    %s105 = scalar_lea.vmem [#allocation1], 8
    %106 = vst [vmem:[%s105] sm:$0xff] %v104
    %vm107 = vcmask 23568
    %s108 = scalar_lea.vmem [#allocation1], 2
    %v109 = vld [vmem:[%s108] ss:$0 sm:$0xff]
    %s110 = scalar_lea.vmem [#allocation0], 2
    %v111 = vld [vmem:[%s110] ss:$0 sm:$0xff]
    %v112 = vmul.f32 %v109, %v109
    %113 = vadd.xlane.f32.xlu0 %v112
    %v114 = vpop.xlane.xlu0 %113
    %v115 = vsub.f32 %v111, %v114
    %v116 = vrsqrt.pop %v115
    %v117 = vld [vmem:[#allocation0] sm:$0xff]
    %v118 = vld [vmem:[#allocation1] sm:$0xff]
    %v119 = vmul.f32 %v118, %v109
    %120 = vadd.xlane.f32.xlu0 %v119
    %v121 = vpop.xlane.xlu0 %120
    %v122 = vsub.f32 %v117, %v121
    %v123 = vmul.f32 %v122, %v116
    %vm124 = vcmask 1047554
    %vm125 = vmand %vm107, %vm124
    %v126 = vsel %vm125, %v123, 0.0
    %v127 = vadd.f32 %v118, %v126
    %128 = vst [vmem:[#allocation1] sm:$0xff] %v127
    %s129 = scalar_lea.vmem [#allocation0], 8
    %v130 = vld [vmem:[%s129] sm:$0xff]
    %s131 = scalar_lea.vmem [#allocation1], 8
    %v132 = vld [vmem:[%s131] sm:$0xff]
    %v133 = vmul.f32 %v132, %v109
    %134 = vadd.xlane.f32.xlu0 %v133
    %v135 = vpop.xlane.xlu0 %134
    %v136 = vsub.f32 %v130, %v135
    %v137 = vmul.f32 %v136, %v116
    %v138 = vsel %vm107, %v137, 0.0
    %v139 = vadd.f32 %v132, %v138
    %s140 = scalar_lea.vmem [#allocation1], 8
    %141 = vst [vmem:[%s140] sm:$0xff] %v139
    %vm142 = vcmask 31768
    %s143 = scalar_lea.vmem [#allocation1], 3
    %v144 = vld [vmem:[%s143] ss:$0 sm:$0xff]
    %s145 = scalar_lea.vmem [#allocation0], 3
    %v146 = vld [vmem:[%s145] ss:$0 sm:$0xff]
    %v147 = vmul.f32 %v144, %v144
    %148 = vadd.xlane.f32.xlu0 %v147
    %v149 = vpop.xlane.xlu0 %148
    %v150 = vsub.f32 %v146, %v149
    %v151 = vrsqrt.pop %v150
    %v152 = vld [vmem:[#allocation0] sm:$0xff]
    %v153 = vld [vmem:[#allocation1] sm:$0xff]
    %v154 = vmul.f32 %v153, %v144
    %155 = vadd.xlane.f32.xlu0 %v154
    %v156 = vpop.xlane.xlu0 %155
    %v157 = vsub.f32 %v152, %v156
    %v158 = vmul.f32 %v157, %v151
    %vm159 = vcmask 1047555
    %vm160 = vmand %vm142, %vm159
    %v161 = vsel %vm160, %v158, 0.0
    %v162 = vadd.f32 %v153, %v161
    %163 = vst [vmem:[#allocation1] sm:$0xff] %v162
    %s164 = scalar_lea.vmem [#allocation0], 8
    %v165 = vld [vmem:[%s164] sm:$0xff]
    %s166 = scalar_lea.vmem [#allocation1], 8
    %v167 = vld [vmem:[%s166] sm:$0xff]
    %v168 = vmul.f32 %v167, %v144
    %169 = vadd.xlane.f32.xlu0 %v168
    %v170 = vpop.xlane.xlu0 %169
    %v171 = vsub.f32 %v165, %v170
    %v172 = vmul.f32 %v171, %v151
    %v173 = vsel %vm142, %v172, 0.0
    %v174 = vadd.f32 %v167, %v173
    %s175 = scalar_lea.vmem [#allocation1], 8
    %176 = vst [vmem:[%s175] sm:$0xff] %v174
    %vm177 = vcmask 39968
    %s178 = scalar_lea.vmem [#allocation1], 4
    %v179 = vld [vmem:[%s178] ss:$0 sm:$0xff]
    %s180 = scalar_lea.vmem [#allocation0], 4
    %v181 = vld [vmem:[%s180] ss:$0 sm:$0xff]
    %v182 = vmul.f32 %v179, %v179
    %183 = vadd.xlane.f32.xlu0 %v182
    %v184 = vpop.xlane.xlu0 %183
    %v185 = vsub.f32 %v181, %v184
    %v186 = vrsqrt.pop %v185
    %v187 = vld [vmem:[#allocation0] sm:$0xff]
    %v188 = vld [vmem:[#allocation1] sm:$0xff]
    %v189 = vmul.f32 %v188, %v179
    %190 = vadd.xlane.f32.xlu0 %v189
    %v191 = vpop.xlane.xlu0 %190
    %v192 = vsub.f32 %v187, %v191
    %v193 = vmul.f32 %v192, %v186
    %vm194 = vcmask 1047556
    %vm195 = vmand %vm177, %vm194
    %v196 = vsel %vm195, %v193, 0.0
    %v197 = vadd.f32 %v188, %v196
    %198 = vst [vmem:[#allocation1] sm:$0xff] %v197
    %s199 = scalar_lea.vmem [#allocation0], 8
    %v200 = vld [vmem:[%s199] sm:$0xff]
    %s201 = scalar_lea.vmem [#allocation1], 8
    %v202 = vld [vmem:[%s201] sm:$0xff]
    %v203 = vmul.f32 %v202, %v179
    %204 = vadd.xlane.f32.xlu0 %v203
    %v205 = vpop.xlane.xlu0 %204
    %v206 = vsub.f32 %v200, %v205
    %v207 = vmul.f32 %v206, %v186
    %v208 = vsel %vm177, %v207, 0.0
    %v209 = vadd.f32 %v202, %v208
    %s210 = scalar_lea.vmem [#allocation1], 8
    %211 = vst [vmem:[%s210] sm:$0xff] %v209
    %vm212 = vcmask 48168
    %s213 = scalar_lea.vmem [#allocation1], 5
    %v214 = vld [vmem:[%s213] ss:$0 sm:$0xff]
    %s215 = scalar_lea.vmem [#allocation0], 5
    %v216 = vld [vmem:[%s215] ss:$0 sm:$0xff]
    %v217 = vmul.f32 %v214, %v214
    %218 = vadd.xlane.f32.xlu0 %v217
    %v219 = vpop.xlane.xlu0 %218
    %v220 = vsub.f32 %v216, %v219
    %v221 = vrsqrt.pop %v220
    %v222 = vld [vmem:[#allocation0] sm:$0xff]
    %v223 = vld [vmem:[#allocation1] sm:$0xff]
    %v224 = vmul.f32 %v223, %v214
    %225 = vadd.xlane.f32.xlu0 %v224
    %v226 = vpop.xlane.xlu0 %225
    %v227 = vsub.f32 %v222, %v226
    %v228 = vmul.f32 %v227, %v221
    %vm229 = vcmask 1047557
    %vm230 = vmand %vm212, %vm229
    %v231 = vsel %vm230, %v228, 0.0
    %v232 = vadd.f32 %v223, %v231
    %233 = vst [vmem:[#allocation1] sm:$0xff] %v232
    %s234 = scalar_lea.vmem [#allocation0], 8
    %v235 = vld [vmem:[%s234] sm:$0xff]
    %s236 = scalar_lea.vmem [#allocation1], 8
    %v237 = vld [vmem:[%s236] sm:$0xff]
    %v238 = vmul.f32 %v237, %v214
    %239 = vadd.xlane.f32.xlu0 %v238
    %v240 = vpop.xlane.xlu0 %239
    %v241 = vsub.f32 %v235, %v240
    %v242 = vmul.f32 %v241, %v221
    %v243 = vsel %vm212, %v242, 0.0
    %v244 = vadd.f32 %v237, %v243
    %s245 = scalar_lea.vmem [#allocation1], 8
    %246 = vst [vmem:[%s245] sm:$0xff] %v244
    %vm247 = vcmask 56368
    %s248 = scalar_lea.vmem [#allocation1], 6
    %v249 = vld [vmem:[%s248] ss:$0 sm:$0xff]
    %s250 = scalar_lea.vmem [#allocation0], 6
    %v251 = vld [vmem:[%s250] ss:$0 sm:$0xff]
    %v252 = vmul.f32 %v249, %v249
    %253 = vadd.xlane.f32.xlu0 %v252
    %v254 = vpop.xlane.xlu0 %253
    %v255 = vsub.f32 %v251, %v254
    %v256 = vrsqrt.pop %v255
    %v257 = vld [vmem:[#allocation0] sm:$0xff]
    %v258 = vld [vmem:[#allocation1] sm:$0xff]
    %v259 = vmul.f32 %v258, %v249
    %260 = vadd.xlane.f32.xlu0 %v259
    %v261 = vpop.xlane.xlu0 %260
    %v262 = vsub.f32 %v257, %v261
    %v263 = vmul.f32 %v262, %v256
    %vm264 = vcmask 1047558
    %vm265 = vmand %vm247, %vm264
    %v266 = vsel %vm265, %v263, 0.0
    %v267 = vadd.f32 %v258, %v266
    %268 = vst [vmem:[#allocation1] sm:$0xff] %v267
    %s269 = scalar_lea.vmem [#allocation0], 8
    %v270 = vld [vmem:[%s269] sm:$0xff]
    %s271 = scalar_lea.vmem [#allocation1], 8
    %v272 = vld [vmem:[%s271] sm:$0xff]
    %v273 = vmul.f32 %v272, %v249
    %274 = vadd.xlane.f32.xlu0 %v273
    %v275 = vpop.xlane.xlu0 %274
    %v276 = vsub.f32 %v270, %v275
    %v277 = vmul.f32 %v276, %v256
    %v278 = vsel %vm247, %v277, 0.0
    %v279 = vadd.f32 %v272, %v278
    %s280 = scalar_lea.vmem [#allocation1], 8
    %281 = vst [vmem:[%s280] sm:$0xff] %v279
    %vm282 = vcmask 64568
    %s283 = scalar_lea.vmem [#allocation1], 7
    %v284 = vld [vmem:[%s283] ss:$0 sm:$0xff]
    %s285 = scalar_lea.vmem [#allocation0], 7
    %v286 = vld [vmem:[%s285] ss:$0 sm:$0xff]
    %v287 = vmul.f32 %v284, %v284
    %288 = vadd.xlane.f32.xlu0 %v287
    %v289 = vpop.xlane.xlu0 %288
    %v290 = vsub.f32 %v286, %v289
    %v291 = vrsqrt.pop %v290
    %v292 = vld [vmem:[#allocation0] sm:$0xff]
    %v293 = vld [vmem:[#allocation1] sm:$0xff]
    %v294 = vmul.f32 %v293, %v284
    %295 = vadd.xlane.f32.xlu0 %v294
    %v296 = vpop.xlane.xlu0 %295
    %v297 = vsub.f32 %v292, %v296
    %v298 = vmul.f32 %v297, %v291
    %vm299 = vcmask 1047559
    %vm300 = vmand %vm282, %vm299
    %v301 = vsel %vm300, %v298, 0.0
    %v302 = vadd.f32 %v293, %v301
    %303 = vst [vmem:[#allocation1] sm:$0xff] %v302
    %s304 = scalar_lea.vmem [#allocation0], 8
    %v305 = vld [vmem:[%s304] sm:$0xff]
    %s306 = scalar_lea.vmem [#allocation1], 8
    %v307 = vld [vmem:[%s306] sm:$0xff]
    %v308 = vmul.f32 %v307, %v284
    %309 = vadd.xlane.f32.xlu0 %v308
    %v310 = vpop.xlane.xlu0 %309
    %v311 = vsub.f32 %v305, %v310
    %v312 = vmul.f32 %v311, %v291
    %v313 = vsel %vm282, %v312, 0.0
    %v314 = vadd.f32 %v307, %v313
    %s315 = scalar_lea.vmem [#allocation1], 8
    %316 = vst [vmem:[%s315] sm:$0xff] %v314
    %vm317 = vcmask 72768
    %s318 = scalar_lea.vmem [#allocation1], 8
    %v319 = vld [vmem:[%s318] ss:$0 sm:$0xff]
    %s320 = scalar_lea.vmem [#allocation0], 8
    %v321 = vld [vmem:[%s320] ss:$0 sm:$0xff]
    %v322 = vmul.f32 %v319, %v319
    %323 = vadd.xlane.f32.xlu0 %v322
    %v324 = vpop.xlane.xlu0 %323
    %v325 = vsub.f32 %v321, %v324
    %v326 = vrsqrt.pop %v325
    %s327 = scalar_lea.vmem [#allocation0], 8
    %v328 = vld [vmem:[%s327] sm:$0xff]
    %s329 = scalar_lea.vmem [#allocation1], 8
    %v330 = vld [vmem:[%s329] sm:$0xff]
    %v331 = vmul.f32 %v330, %v319
    %332 = vadd.xlane.f32.xlu0 %v331
    %v333 = vpop.xlane.xlu0 %332
    %v334 = vsub.f32 %v328, %v333
    %v335 = vmul.f32 %v334, %v326
    %v336 = vsel %vm317, %v335, 0.0
    %v337 = vadd.f32 %v330, %v336
    %s338 = scalar_lea.vmem [#allocation1], 8
    %339 = vst [vmem:[%s338] sm:$0xff] %v337
    %vm340 = vcmask 80968
    %s341 = scalar_lea.vmem [#allocation1], 9
    %v342 = vld [vmem:[%s341] ss:$0 sm:$0xff]
    %s343 = scalar_lea.vmem [#allocation0], 9
    %v344 = vld [vmem:[%s343] ss:$0 sm:$0xff]
    %v345 = vmul.f32 %v342, %v342
    %346 = vadd.xlane.f32.xlu0 %v345
    %v347 = vpop.xlane.xlu0 %346
    %v348 = vsub.f32 %v344, %v347
    %v349 = vrsqrt.pop %v348
    %s350 = scalar_lea.vmem [#allocation0], 8
    %v351 = vld [vmem:[%s350] sm:$0xff]
    %s352 = scalar_lea.vmem [#allocation1], 8
    %v353 = vld [vmem:[%s352] sm:$0xff]
    %v354 = vmul.f32 %v353, %v342
    %355 = vadd.xlane.f32.xlu0 %v354
    %v356 = vpop.xlane.xlu0 %355
    %v357 = vsub.f32 %v351, %v356
    %v358 = vmul.f32 %v357, %v349
    %vm359 = vcmask 1047553
    %vm360 = vmand %vm340, %vm359
    %v361 = vsel %vm360, %v358, 0.0
    %v362 = vadd.f32 %v353, %v361
    %s363 = scalar_lea.vmem [#allocation1], 8
    %364 = vst [vmem:[%s363] sm:$0xff] %v362
    %vm365 = vcmask 89168
    %s366 = scalar_lea.vmem [#allocation1], 10
    %v367 = vld [vmem:[%s366] ss:$0 sm:$0xff]
    %s368 = scalar_lea.vmem [#allocation0], 10
    %v369 = vld [vmem:[%s368] ss:$0 sm:$0xff]
    %v370 = vmul.f32 %v367, %v367
    %371 = vadd.xlane.f32.xlu0 %v370
    %v372 = vpop.xlane.xlu0 %371
    %v373 = vsub.f32 %v369, %v372
    %v374 = vrsqrt.pop %v373
    %s375 = scalar_lea.vmem [#allocation0], 8
    %v376 = vld [vmem:[%s375] sm:$0xff]
    %s377 = scalar_lea.vmem [#allocation1], 8
    %v378 = vld [vmem:[%s377] sm:$0xff]
    %v379 = vmul.f32 %v378, %v367
    %380 = vadd.xlane.f32.xlu0 %v379
    %v381 = vpop.xlane.xlu0 %380
    %v382 = vsub.f32 %v376, %v381
    %v383 = vmul.f32 %v382, %v374
    %vm384 = vcmask 1047554
    %vm385 = vmand %vm365, %vm384
    %v386 = vsel %vm385, %v383, 0.0
    %v387 = vadd.f32 %v378, %v386
    %s388 = scalar_lea.vmem [#allocation1], 8
    %389 = vst [vmem:[%s388] sm:$0xff] %v387
    %vm390 = vcmask 97368
    %s391 = scalar_lea.vmem [#allocation1], 11
    %v392 = vld [vmem:[%s391] ss:$0 sm:$0xff]
    %s393 = scalar_lea.vmem [#allocation0], 11
    %v394 = vld [vmem:[%s393] ss:$0 sm:$0xff]
    %v395 = vmul.f32 %v392, %v392
    %396 = vadd.xlane.f32.xlu0 %v395
    %v397 = vpop.xlane.xlu0 %396
    %v398 = vsub.f32 %v394, %v397
    %v399 = vrsqrt.pop %v398
    %s400 = scalar_lea.vmem [#allocation0], 8
    %v401 = vld [vmem:[%s400] sm:$0xff]
    %s402 = scalar_lea.vmem [#allocation1], 8
    %v403 = vld [vmem:[%s402] sm:$0xff]
    %v404 = vmul.f32 %v403, %v392
    %405 = vadd.xlane.f32.xlu0 %v404
    %v406 = vpop.xlane.xlu0 %405
    %v407 = vsub.f32 %v401, %v406
    %v408 = vmul.f32 %v407, %v399
    %vm409 = vcmask 1047555
    %vm410 = vmand %vm390, %vm409
    %v411 = vsel %vm410, %v408, 0.0
    %v412 = vadd.f32 %v403, %v411
    %s413 = scalar_lea.vmem [#allocation1], 8
    %414 = vst [vmem:[%s413] sm:$0xff] %v412
    %vm415 = vcmask 105568
    %s416 = scalar_lea.vmem [#allocation1], 12
    %v417 = vld [vmem:[%s416] ss:$0 sm:$0xff]
    %s418 = scalar_lea.vmem [#allocation0], 12
    %v419 = vld [vmem:[%s418] ss:$0 sm:$0xff]
    %v420 = vmul.f32 %v417, %v417
    %421 = vadd.xlane.f32.xlu0 %v420
    %v422 = vpop.xlane.xlu0 %421
    %v423 = vsub.f32 %v419, %v422
    %v424 = vrsqrt.pop %v423
    %s425 = scalar_lea.vmem [#allocation0], 8
    %v426 = vld [vmem:[%s425] sm:$0xff]
    %s427 = scalar_lea.vmem [#allocation1], 8
    %v428 = vld [vmem:[%s427] sm:$0xff]
    %v429 = vmul.f32 %v428, %v417
    %430 = vadd.xlane.f32.xlu0 %v429
    %v431 = vpop.xlane.xlu0 %430
    %v432 = vsub.f32 %v426, %v431
    %v433 = vmul.f32 %v432, %v424
    %vm434 = vcmask 1047556
    %vm435 = vmand %vm415, %vm434
    %v436 = vsel %vm435, %v433, 0.0
    %v437 = vadd.f32 %v428, %v436
    %s438 = scalar_lea.vmem [#allocation1], 8
    %439 = vst [vmem:[%s438] sm:$0xff] %v437
    %vm440 = vcmask 113768
    %s441 = scalar_lea.vmem [#allocation1], 13
    %v442 = vld [vmem:[%s441] ss:$0 sm:$0xff]
    %s443 = scalar_lea.vmem [#allocation0], 13
    %v444 = vld [vmem:[%s443] ss:$0 sm:$0xff]
    %v445 = vmul.f32 %v442, %v442
    %446 = vadd.xlane.f32.xlu0 %v445
    %v447 = vpop.xlane.xlu0 %446
    %v448 = vsub.f32 %v444, %v447
    %v449 = vrsqrt.pop %v448
    %s450 = scalar_lea.vmem [#allocation0], 8
    %v451 = vld [vmem:[%s450] sm:$0xff]
    %s452 = scalar_lea.vmem [#allocation1], 8
    %v453 = vld [vmem:[%s452] sm:$0xff]
    %v454 = vmul.f32 %v453, %v442
    %455 = vadd.xlane.f32.xlu0 %v454
    %v456 = vpop.xlane.xlu0 %455
    %v457 = vsub.f32 %v451, %v456
    %v458 = vmul.f32 %v457, %v449
    %vm459 = vcmask 1047557
    %vm460 = vmand %vm440, %vm459
    %v461 = vsel %vm460, %v458, 0.0
    %v462 = vadd.f32 %v453, %v461
    %s463 = scalar_lea.vmem [#allocation1], 8
    %464 = vst [vmem:[%s463] sm:$0xff] %v462
    %vm465 = vcmask 121968
    %s466 = scalar_lea.vmem [#allocation1], 14
    %v467 = vld [vmem:[%s466] ss:$0 sm:$0xff]
    %s468 = scalar_lea.vmem [#allocation0], 14
    %v469 = vld [vmem:[%s468] ss:$0 sm:$0xff]
    %v470 = vmul.f32 %v467, %v467
    %471 = vadd.xlane.f32.xlu0 %v470
    %v472 = vpop.xlane.xlu0 %471
    %v473 = vsub.f32 %v469, %v472
    %v474 = vrsqrt.pop %v473
    %s475 = scalar_lea.vmem [#allocation0], 8
    %v476 = vld [vmem:[%s475] sm:$0xff]
    %s477 = scalar_lea.vmem [#allocation1], 8
    %v478 = vld [vmem:[%s477] sm:$0xff]
    %v479 = vmul.f32 %v478, %v467
    %480 = vadd.xlane.f32.xlu0 %v479
    %v481 = vpop.xlane.xlu0 %480
    %v482 = vsub.f32 %v476, %v481
    %v483 = vmul.f32 %v482, %v474
    %vm484 = vcmask 1047558
    %vm485 = vmand %vm465, %vm484
    %v486 = vsel %vm485, %v483, 0.0
    %v487 = vadd.f32 %v478, %v486
    %s488 = scalar_lea.vmem [#allocation1], 8
    %489 = vst [vmem:[%s488] sm:$0xff] %v487
    %vm490 = vcmask 130168
    %s491 = scalar_lea.vmem [#allocation1], 15
    %v492 = vld [vmem:[%s491] ss:$0 sm:$0xff]
    %s493 = scalar_lea.vmem [#allocation0], 15
    %v494 = vld [vmem:[%s493] ss:$0 sm:$0xff]
    %v495 = vmul.f32 %v492, %v492
    %496 = vadd.xlane.f32.xlu0 %v495
    %v497 = vpop.xlane.xlu0 %496
    %v498 = vsub.f32 %v494, %v497
    %v499 = vrsqrt.pop %v498
    %s500 = scalar_lea.vmem [#allocation0], 8
    %v501 = vld [vmem:[%s500] sm:$0xff]
    %s502 = scalar_lea.vmem [#allocation1], 8
    %v503 = vld [vmem:[%s502] sm:$0xff]
    %v504 = vmul.f32 %v503, %v492
    %505 = vadd.xlane.f32.xlu0 %v504
    %v506 = vpop.xlane.xlu0 %505
    %v507 = vsub.f32 %v501, %v506
    %v508 = vmul.f32 %v507, %v499
    %vm509 = vcmask 1047559
    %vm510 = vmand %vm490, %vm509
    %v511 = vsel %vm510, %v508, 0.0
    %v512 = vadd.f32 %v503, %v511
    %s513 = scalar_lea.vmem [#allocation1], 8
    %514 = vst [vmem:[%s513] sm:$0xff] %v512
    // Predicated region
    $region36: #{custom-call.4} parent=1 // pred_check
      _
    $region37: #{custom-call.4} parent=1 // pred_check_branch
      %516 = sbr.rel (0) target = $region39
    $region38: #{custom-call.4} parent=1 // pred_region
      // Predicated region
      $region40: #{custom-call.4} parent=38 // pred_check
        _
      $region41: #{custom-call.4} parent=38 // pred_check_branch
        %518 = sbr.rel (0) target = $region43
      $region42: #{custom-call.4} parent=38 // pred_region
        // Predicated region
        $region55: #{custom-call.4} parent=42 // pred_check
          _
        $region56: #{custom-call.4} parent=42 // pred_check_branch
          %535 = sbr.rel (0) target = $region58
        $region57: #{custom-call.4} parent=42 // pred_region
          loop: start=0, step=1, limit=1
          $region59: #{custom-call.4} parent=57 // loop_pre_header
            _
          $region60: #{custom-call.4} parent=57 // loop_header
            %s537 = sphi 0, %s541
            %p538 = scmp.ge.s32.totalorder %s537, 1
            %s542 = sphi [#allocation1], [#allocation1]
            %s543 = sphi %s1, %s1
          $region61: #{custom-call.4} parent=57 // loop_header_branch
            %540 = sbr.rel (%p538) target = $region65
          $region62: #{custom-call.4} parent=57 // loop_body
            %v544 = vld [vmem:[%s542] sm:$0xff]
            %545 = vst [vmem:[%s543] sm:$0xff] %v544
            %v546 = vld [vmem:[%s542 + $0x8] sm:$0xff]
            %547 = vst [vmem:[%s543 + $0x8] sm:$0xff] %v546
          $region63: #{custom-call.4} parent=57 // loop_footer
            %s541 = sadd.s32 1, %s537
          $region64: #{custom-call.4} parent=57 // loop_footer_branch
            %536 = sbr.rel target = $region60
          $region65: #{custom-call.4} parent=57 // loop_exit
            _
        $region58: #{custom-call.4} parent=42 // pred_fallthru
          _
        // Predicated region
        $region66: #{custom-call.4} parent=42 // pred_check
          _
        $region67: #{custom-call.4} parent=42 // pred_check_branch
          %549 = sbr.rel target = $region69
        $region68: #{custom-call.4} parent=42 // pred_region
          _
        $region69: #{custom-call.4} parent=42 // pred_fallthru
          _
      $region43: #{custom-call.4} parent=38 // pred_fallthru
        _
      // Predicated region
      $region44: #{custom-call.4} parent=38 // pred_check
        _
      $region45: #{custom-call.4} parent=38 // pred_check_branch
        %520 = sbr.rel target = $region47
      $region46: #{custom-call.4} parent=38 // pred_region
        loop: start=0, step=1, limit=1
        $region48: #{custom-call.4} parent=46 // loop_pre_header
          _
        $region49: #{custom-call.4} parent=46 // loop_header
          %s523 = sphi 0, %s527
          %p524 = scmp.ge.s32.totalorder %s523, 1
          %s528 = sphi [#allocation1], [#allocation1]
          %s529 = sphi %s1, %s1
        $region50: #{custom-call.4} parent=46 // loop_header_branch
          %526 = sbr.rel (%p524) target = $region54
        $region51: #{custom-call.4} parent=46 // loop_body
          %v530 = vld [vmem:[%s528] sm:$0xff]
          %531 = vst [vmem:[%s529] sm:$0xff] %v530
          %v532 = vld [vmem:[%s528 + $0x8] sm:$0xff]
          %533 = vst [vmem:[%s529 + $0x8] sm:$0xff] %v532
        $region52: #{custom-call.4} parent=46 // loop_footer
          %s527 = sadd.s32 1, %s523
        $region53: #{custom-call.4} parent=46 // loop_footer_branch
          %522 = sbr.rel target = $region49
        $region54: #{custom-call.4} parent=46 // loop_exit
          _
      $region47: #{custom-call.4} parent=38 // pred_fallthru
        _
    $region39: #{custom-call.4} parent=1 // pred_fallthru
      _
    %550 = vnop

// kernel: custom-call.5
$region0: #{custom-call.5}
  %s0 = inlined_call_operand.vmem [shape: f32[1,16,16], index: 0, kind: input, shape index: {}]
  %s1 = inlined_call_operand.vmem [shape: f32[1,16,16], index: 1, kind: output, shape index: {}]
  $region1: #{custom-call.5} parent=0
    #allocation0 [shape = 'u8[8192]{0}', space=vmem, size = 0x2000, scoped, tag = 'operand span for operand 0']
    #allocation1 [shape = 'u8[8192]{0}', space=vmem, size = 0x2000, scoped, tag = 'operand span for operand 1']
    #allocation2 [shape = 'f32[16,16]{1,0}', space=vmem, size = 0x2000, scoped, tag = 'rescaled input a']
    // Predicated region
    $region2: #{custom-call.5} parent=1 // pred_check
      _
    $region3: #{custom-call.5} parent=1 // pred_check_branch
      %3 = sbr.rel (0) target = $region5
    $region4: #{custom-call.5} parent=1 // pred_region
      // Predicated region
      $region6: #{custom-call.5} parent=4 // pred_check
        _
      $region7: #{custom-call.5} parent=4 // pred_check_branch
        %5 = sbr.rel (0) target = $region9
      $region8: #{custom-call.5} parent=4 // pred_region
        // Predicated region
        $region21: #{custom-call.5} parent=8 // pred_check
          _
        $region22: #{custom-call.5} parent=8 // pred_check_branch
          %22 = sbr.rel (0) target = $region24
        $region23: #{custom-call.5} parent=8 // pred_region
          loop: start=0, step=1, limit=1
          $region25: #{custom-call.5} parent=23 // loop_pre_header
            _
          $region26: #{custom-call.5} parent=23 // loop_header
            %s24 = sphi 0, %s28
            %p25 = scmp.ge.s32.totalorder %s24, 1
            %s29 = sphi %s0, %s0
            %s30 = sphi [#allocation0], [#allocation0]
          $region27: #{custom-call.5} parent=23 // loop_header_branch
            %27 = sbr.rel (%p25) target = $region31
          $region28: #{custom-call.5} parent=23 // loop_body
            %v31 = vld [vmem:[%s29] sm:$0xff]
            %32 = vst [vmem:[%s30] sm:$0xff] %v31
            %v33 = vld [vmem:[%s29 + $0x8] sm:$0xff]
            %34 = vst [vmem:[%s30 + $0x8] sm:$0xff] %v33
          $region29: #{custom-call.5} parent=23 // loop_footer
            %s28 = sadd.s32 1, %s24
          $region30: #{custom-call.5} parent=23 // loop_footer_branch
            %23 = sbr.rel target = $region26
          $region31: #{custom-call.5} parent=23 // loop_exit
            _
        $region24: #{custom-call.5} parent=8 // pred_fallthru
          _
        // Predicated region
        $region32: #{custom-call.5} parent=8 // pred_check
          _
        $region33: #{custom-call.5} parent=8 // pred_check_branch
          %36 = sbr.rel target = $region35
        $region34: #{custom-call.5} parent=8 // pred_region
          _
        $region35: #{custom-call.5} parent=8 // pred_fallthru
          _
      $region9: #{custom-call.5} parent=4 // pred_fallthru
        _
      // Predicated region
      $region10: #{custom-call.5} parent=4 // pred_check
        _
      $region11: #{custom-call.5} parent=4 // pred_check_branch
        %7 = sbr.rel target = $region13
      $region12: #{custom-call.5} parent=4 // pred_region
        loop: start=0, step=1, limit=1
        $region14: #{custom-call.5} parent=12 // loop_pre_header
          _
        $region15: #{custom-call.5} parent=12 // loop_header
          %s10 = sphi 0, %s14
          %p11 = scmp.ge.s32.totalorder %s10, 1
          %s15 = sphi %s0, %s0
          %s16 = sphi [#allocation0], [#allocation0]
        $region16: #{custom-call.5} parent=12 // loop_header_branch
          %13 = sbr.rel (%p11) target = $region20
        $region17: #{custom-call.5} parent=12 // loop_body
          %v17 = vld [vmem:[%s15] sm:$0xff]
          %18 = vst [vmem:[%s16] sm:$0xff] %v17
          %v19 = vld [vmem:[%s15 + $0x8] sm:$0xff]
          %20 = vst [vmem:[%s16 + $0x8] sm:$0xff] %v19
        $region18: #{custom-call.5} parent=12 // loop_footer
          %s14 = sadd.s32 1, %s10
        $region19: #{custom-call.5} parent=12 // loop_footer_branch
          %9 = sbr.rel target = $region15
        $region20: #{custom-call.5} parent=12 // loop_exit
          _
      $region13: #{custom-call.5} parent=4 // pred_fallthru
        _
    $region5: #{custom-call.5} parent=1 // pred_fallthru
      _
    %37 = vnop
    %v38 = vlaneseq
    %v39 = vand.u32 %v38, 127
    %vm40 = vcmp.lt.s32.totalorder %v39, 16
    %v41 = vlaneseq
    %v42 = vshrl.u32 %v41, 7
    %vm44 = vcmp.eq.s32.totalorder %v42, %v39
    %v45 = vld [vmem:[#allocation0] sm:$0xff]
    %v46 = vsel %vm44, %v45, 0.0
    %47 = vadd.xlane.f32.xlu0 %v46
    %v48 = vpop.xlane.xlu0 %47
    %vm49 = vcmp.ge.s32.totalorder %v42, %v39
    %vm50 = vmand %vm49, %vm40
    %v51 = vsel %vm50, %v45, 0.0
    %v52 = vrcp.pop %v48
    %v53 = vmul.f32 %v51, %v52
    %54 = vst [vmem:[#allocation2] sm:$0xff] %v53
    %s55 = scalar_lea.vmem [#allocation0], 8
    %s56 = scalar_lea.vmem [#allocation2], 8
    %v57 = vlaneseq
    %v58 = vshrl.u32 %v57, 7
    %v59 = vadd.s32 %v58, 8
    %vm60 = vcmp.eq.s32.totalorder %v59, %v39
    %v61 = vld [vmem:[%s55] sm:$0xff]
    %v62 = vsel %vm60, %v61, 0.0
    %63 = vadd.xlane.f32.xlu0 %v62
    %v64 = vpop.xlane.xlu0 %63
    %vm65 = vcmp.ge.s32.totalorder %v59, %v39
    %vm66 = vmand %vm65, %vm40
    %v67 = vsel %vm66, %v61, 0.0
    %v68 = vrcp.pop %v64
    %v69 = vmul.f32 %v67, %v68
    %70 = vst [vmem:[%s56] sm:$0xff] %v69
    %v71 = vlaneseq
    %v72 = vand.u32 %v71, 127
    %v73 = vlaneseq
    %v74 = vshrl.u32 %v73, 7
    %vm76 = vcmp.eq.s32.totalorder %v72, %v74
    %v77 = vlaneseq
    %v78 = vand.u32 %v77, 127
    %vm79 = vcmp.eq.s32.totalorder %v78, 0
    %v80 = vsel %vm79, 1.0, -1.0
    %v81 = vsel %vm76, %v80, 0.0
    %v82 = vlaneseq
    %v83 = vand.u32 %v82, 127
    %v84 = vlaneseq
    %v85 = vshrl.u32 %v84, 7
    %v86 = vadd.s32 %v85, 8
    %vm87 = vcmp.eq.s32.totalorder %v83, %v86
    %v88 = vsel %vm87, -1.0, 0.0
    %s89 = scalar_lea.vmem [#allocation2], 1
    %v90 = vld [vmem:[%s89] ss:$0 sm:$0xff]
    %v91 = vxor.u32 %v90, 2147483648
    %v92 = vlaneseq
    %v93 = vand.u32 %v92, 127
    %vm94 = vcmp.eq.s32.totalorder %v93, 1
    %v95 = vmul.f32 %v91, %v81
    %96 = vadd.xlane.f32.xlu0 %v95
    %v97 = vpop.xlane.xlu0 %96
    %v98 = vsel %vm94, %v97, %v81
    %s99 = scalar_lea.vmem [#allocation2], 2
    %v100 = vld [vmem:[%s99] ss:$0 sm:$0xff]
    %v101 = vxor.u32 %v100, 2147483648
    %v102 = vlaneseq
    %v103 = vand.u32 %v102, 127
    %vm104 = vcmp.eq.s32.totalorder %v103, 2
    %v105 = vmul.f32 %v101, %v98
    %106 = vadd.xlane.f32.xlu0 %v105
    %v107 = vpop.xlane.xlu0 %106
    %v108 = vsel %vm104, %v107, %v98
    %s109 = scalar_lea.vmem [#allocation2], 3
    %v110 = vld [vmem:[%s109] ss:$0 sm:$0xff]
    %v111 = vxor.u32 %v110, 2147483648
    %v112 = vlaneseq
    %v113 = vand.u32 %v112, 127
    %vm114 = vcmp.eq.s32.totalorder %v113, 3
    %v115 = vmul.f32 %v111, %v108
    %116 = vadd.xlane.f32.xlu0 %v115
    %v117 = vpop.xlane.xlu0 %116
    %v118 = vsel %vm114, %v117, %v108
    %s119 = scalar_lea.vmem [#allocation2], 4
    %v120 = vld [vmem:[%s119] ss:$0 sm:$0xff]
    %v121 = vxor.u32 %v120, 2147483648
    %v122 = vlaneseq
    %v123 = vand.u32 %v122, 127
    %vm124 = vcmp.eq.s32.totalorder %v123, 4
    %v125 = vmul.f32 %v121, %v118
    %126 = vadd.xlane.f32.xlu0 %v125
    %v127 = vpop.xlane.xlu0 %126
    %v128 = vsel %vm124, %v127, %v118
    %s129 = scalar_lea.vmem [#allocation2], 5
    %v130 = vld [vmem:[%s129] ss:$0 sm:$0xff]
    %v131 = vxor.u32 %v130, 2147483648
    %v132 = vlaneseq
    %v133 = vand.u32 %v132, 127
    %vm134 = vcmp.eq.s32.totalorder %v133, 5
    %v135 = vmul.f32 %v131, %v128
    %136 = vadd.xlane.f32.xlu0 %v135
    %v137 = vpop.xlane.xlu0 %136
    %v138 = vsel %vm134, %v137, %v128
    %s139 = scalar_lea.vmem [#allocation2], 6
    %v140 = vld [vmem:[%s139] ss:$0 sm:$0xff]
    %v141 = vxor.u32 %v140, 2147483648
    %v142 = vlaneseq
    %v143 = vand.u32 %v142, 127
    %vm144 = vcmp.eq.s32.totalorder %v143, 6
    %v145 = vmul.f32 %v141, %v138
    %146 = vadd.xlane.f32.xlu0 %v145
    %v147 = vpop.xlane.xlu0 %146
    %v148 = vsel %vm144, %v147, %v138
    %s149 = scalar_lea.vmem [#allocation2], 7
    %v150 = vld [vmem:[%s149] ss:$0 sm:$0xff]
    %v151 = vxor.u32 %v150, 2147483648
    %v152 = vlaneseq
    %v153 = vand.u32 %v152, 127
    %vm154 = vcmp.eq.s32.totalorder %v153, 7
    %v155 = vmul.f32 %v151, %v148
    %156 = vadd.xlane.f32.xlu0 %v155
    %v157 = vpop.xlane.xlu0 %156
    %v158 = vsel %vm154, %v157, %v148
    %s159 = scalar_lea.vmem [#allocation2], 8
    %v160 = vld [vmem:[%s159] ss:$0 sm:$0xff]
    %v161 = vxor.u32 %v160, 2147483648
    %v162 = vlaneseq
    %v163 = vand.u32 %v162, 127
    %vm164 = vcmp.eq.s32.totalorder %v163, 8
    %v165 = vmul.f32 %v161, %v158
    %166 = vadd.xlane.f32.xlu0 %v165
    %v167 = vpop.xlane.xlu0 %166
    %v168 = vsel %vm164, %v167, %v158
    %v169 = vmul.f32 %v161, %v88
    %170 = vadd.xlane.f32.xlu0 %v169
    %v171 = vpop.xlane.xlu0 %170
    %v172 = vsel %vm164, %v171, %v88
    %s173 = scalar_lea.vmem [#allocation2], 9
    %v174 = vld [vmem:[%s173] ss:$0 sm:$0xff]
    %v175 = vxor.u32 %v174, 2147483648
    %v176 = vlaneseq
    %v177 = vand.u32 %v176, 127
    %vm178 = vcmp.eq.s32.totalorder %v177, 9
    %v179 = vmul.f32 %v175, %v168
    %180 = vadd.xlane.f32.xlu0 %v179
    %v181 = vpop.xlane.xlu0 %180
    %v182 = vsel %vm178, %v181, %v168
    %v183 = vmul.f32 %v175, %v172
    %184 = vadd.xlane.f32.xlu0 %v183
    %v185 = vpop.xlane.xlu0 %184
    %v186 = vsel %vm178, %v185, %v172
    %s187 = scalar_lea.vmem [#allocation2], 10
    %v188 = vld [vmem:[%s187] ss:$0 sm:$0xff]
    %v189 = vxor.u32 %v188, 2147483648
    %v190 = vlaneseq
    %v191 = vand.u32 %v190, 127
    %vm192 = vcmp.eq.s32.totalorder %v191, 10
    %v193 = vmul.f32 %v189, %v182
    %194 = vadd.xlane.f32.xlu0 %v193
    %v195 = vpop.xlane.xlu0 %194
    %v196 = vsel %vm192, %v195, %v182
    %v197 = vmul.f32 %v189, %v186
    %198 = vadd.xlane.f32.xlu0 %v197
    %v199 = vpop.xlane.xlu0 %198
    %v200 = vsel %vm192, %v199, %v186
    %s201 = scalar_lea.vmem [#allocation2], 11
    %v202 = vld [vmem:[%s201] ss:$0 sm:$0xff]
    %v203 = vxor.u32 %v202, 2147483648
    %v204 = vlaneseq
    %v205 = vand.u32 %v204, 127
    %vm206 = vcmp.eq.s32.totalorder %v205, 11
    %v207 = vmul.f32 %v203, %v196
    %208 = vadd.xlane.f32.xlu0 %v207
    %v209 = vpop.xlane.xlu0 %208
    %v210 = vsel %vm206, %v209, %v196
    %v211 = vmul.f32 %v203, %v200
    %212 = vadd.xlane.f32.xlu0 %v211
    %v213 = vpop.xlane.xlu0 %212
    %v214 = vsel %vm206, %v213, %v200
    %s215 = scalar_lea.vmem [#allocation2], 12
    %v216 = vld [vmem:[%s215] ss:$0 sm:$0xff]
    %v217 = vxor.u32 %v216, 2147483648
    %v218 = vlaneseq
    %v219 = vand.u32 %v218, 127
    %vm220 = vcmp.eq.s32.totalorder %v219, 12
    %v221 = vmul.f32 %v217, %v210
    %222 = vadd.xlane.f32.xlu0 %v221
    %v223 = vpop.xlane.xlu0 %222
    %v224 = vsel %vm220, %v223, %v210
    %v225 = vmul.f32 %v217, %v214
    %226 = vadd.xlane.f32.xlu0 %v225
    %v227 = vpop.xlane.xlu0 %226
    %v228 = vsel %vm220, %v227, %v214
    %s229 = scalar_lea.vmem [#allocation2], 13
    %v230 = vld [vmem:[%s229] ss:$0 sm:$0xff]
    %v231 = vxor.u32 %v230, 2147483648
    %v232 = vlaneseq
    %v233 = vand.u32 %v232, 127
    %vm234 = vcmp.eq.s32.totalorder %v233, 13
    %v235 = vmul.f32 %v231, %v224
    %236 = vadd.xlane.f32.xlu0 %v235
    %v237 = vpop.xlane.xlu0 %236
    %v238 = vsel %vm234, %v237, %v224
    %v239 = vmul.f32 %v231, %v228
    %240 = vadd.xlane.f32.xlu0 %v239
    %v241 = vpop.xlane.xlu0 %240
    %v242 = vsel %vm234, %v241, %v228
    %s243 = scalar_lea.vmem [#allocation2], 14
    %v244 = vld [vmem:[%s243] ss:$0 sm:$0xff]
    %v245 = vxor.u32 %v244, 2147483648
    %v246 = vlaneseq
    %v247 = vand.u32 %v246, 127
    %vm248 = vcmp.eq.s32.totalorder %v247, 14
    %v249 = vmul.f32 %v245, %v238
    %250 = vadd.xlane.f32.xlu0 %v249
    %v251 = vpop.xlane.xlu0 %250
    %v252 = vsel %vm248, %v251, %v238
    %v253 = vmul.f32 %v245, %v242
    %254 = vadd.xlane.f32.xlu0 %v253
    %v255 = vpop.xlane.xlu0 %254
    %v256 = vsel %vm248, %v255, %v242
    %s257 = scalar_lea.vmem [#allocation2], 15
    %v258 = vld [vmem:[%s257] ss:$0 sm:$0xff]
    %v259 = vxor.u32 %v258, 2147483648
    %v260 = vlaneseq
    %v261 = vand.u32 %v260, 127
    %vm262 = vcmp.eq.s32.totalorder %v261, 15
    %v263 = vmul.f32 %v259, %v252
    %264 = vadd.xlane.f32.xlu0 %v263
    %v265 = vpop.xlane.xlu0 %264
    %v266 = vsel %vm262, %v265, %v252
    %v267 = vmul.f32 %v259, %v256
    %268 = vadd.xlane.f32.xlu0 %v267
    %v269 = vpop.xlane.xlu0 %268
    %v270 = vsel %vm262, %v269, %v256
    %v271 = vrcp.pop %v48
    %v272 = vmul.f32 %v266, %v271
    %vm273 = vweird.f32 %v48
    %v274 = vsel %vm273, %v266, %v272
    %275 = vst [vmem:[#allocation1] sm:$0xff] %v274
    %v276 = vrcp.pop %v64
    %v277 = vmul.f32 %v270, %v276
    %vm278 = vweird.f32 %v64
    %v279 = vsel %vm278, %v270, %v277
    %s280 = scalar_lea.vmem [#allocation1], 8
    %281 = vst [vmem:[%s280] sm:$0xff] %v279
    // Predicated region
    $region36: #{custom-call.5} parent=1 // pred_check
      _
    $region37: #{custom-call.5} parent=1 // pred_check_branch
      %283 = sbr.rel (0) target = $region39
    $region38: #{custom-call.5} parent=1 // pred_region
      // Predicated region
      $region40: #{custom-call.5} parent=38 // pred_check
        _
      $region41: #{custom-call.5} parent=38 // pred_check_branch
        %285 = sbr.rel (0) target = $region43
      $region42: #{custom-call.5} parent=38 // pred_region
        // Predicated region
        $region55: #{custom-call.5} parent=42 // pred_check
          _
        $region56: #{custom-call.5} parent=42 // pred_check_branch
          %302 = sbr.rel (0) target = $region58
        $region57: #{custom-call.5} parent=42 // pred_region
          loop: start=0, step=1, limit=1
          $region59: #{custom-call.5} parent=57 // loop_pre_header
            _
          $region60: #{custom-call.5} parent=57 // loop_header
            %s304 = sphi 0, %s308
            %p305 = scmp.ge.s32.totalorder %s304, 1
            %s309 = sphi [#allocation1], [#allocation1]
            %s310 = sphi %s1, %s1
          $region61: #{custom-call.5} parent=57 // loop_header_branch
            %307 = sbr.rel (%p305) target = $region65
          $region62: #{custom-call.5} parent=57 // loop_body
            %v311 = vld [vmem:[%s309] sm:$0xff]
            %312 = vst [vmem:[%s310] sm:$0xff] %v311
            %v313 = vld [vmem:[%s309 + $0x8] sm:$0xff]
            %314 = vst [vmem:[%s310 + $0x8] sm:$0xff] %v313
          $region63: #{custom-call.5} parent=57 // loop_footer
            %s308 = sadd.s32 1, %s304
          $region64: #{custom-call.5} parent=57 // loop_footer_branch
            %303 = sbr.rel target = $region60
          $region65: #{custom-call.5} parent=57 // loop_exit
            _
        $region58: #{custom-call.5} parent=42 // pred_fallthru
          _
        // Predicated region
        $region66: #{custom-call.5} parent=42 // pred_check
          _
        $region67: #{custom-call.5} parent=42 // pred_check_branch
          %316 = sbr.rel target = $region69
        $region68: #{custom-call.5} parent=42 // pred_region
          _
        $region69: #{custom-call.5} parent=42 // pred_fallthru
          _
      $region43: #{custom-call.5} parent=38 // pred_fallthru
        _
      // Predicated region
      $region44: #{custom-call.5} parent=38 // pred_check
        _
      $region45: #{custom-call.5} parent=38 // pred_check_branch
        %287 = sbr.rel target = $region47
      $region46: #{custom-call.5} parent=38 // pred_region
        loop: start=0, step=1, limit=1
        $region48: #{custom-call.5} parent=46 // loop_pre_header
          _
        $region49: #{custom-call.5} parent=46 // loop_header
          %s290 = sphi 0, %s294
          %p291 = scmp.ge.s32.totalorder %s290, 1
          %s295 = sphi [#allocation1], [#allocation1]
          %s296 = sphi %s1, %s1
        $region50: #{custom-call.5} parent=46 // loop_header_branch
          %293 = sbr.rel (%p291) target = $region54
        $region51: #{custom-call.5} parent=46 // loop_body
          %v297 = vld [vmem:[%s295] sm:$0xff]
          %298 = vst [vmem:[%s296] sm:$0xff] %v297
          %v299 = vld [vmem:[%s295 + $0x8] sm:$0xff]
          %300 = vst [vmem:[%s296 + $0x8] sm:$0xff] %v299
        $region52: #{custom-call.5} parent=46 // loop_footer
          %s294 = sadd.s32 1, %s290
        $region53: #{custom-call.5} parent=46 // loop_footer_branch
          %289 = sbr.rel target = $region49
        $region54: #{custom-call.5} parent=46 // loop_exit
          _
      $region47: #{custom-call.5} parent=38 // pred_fallthru
        _
    $region39: #{custom-call.5} parent=1 // pred_fallthru
      _
    %317 = vnop

// kernel: _train.2
$region0: #{_train.2}
  #allocation0 [shape = 'u32[]', space=smem, size = 0x4, offset = 0x4, fixed_abs, tag = 'smem constant byte address 0x4 - core index']
  #allocation1 [shape = 'u32[144,128]{1,0:T(1,128)}', space=vmem, size = 0x12000, scoped, tag = 'internal scratch']
  %s0 = inlined_call_operand.vmem [shape: f32[16,128], index: 0, kind: input, shape index: {}]
  %s1 = inlined_call_operand.vmem [shape: f32[1,128,128], index: 1, kind: output, shape index: {}]
  %s2 = sld [smem:[#allocation0]]
  $region22: #{_train.2} parent=0
    _
  %s4 = ssub.s32 1, %s2
  %s5 = scalar_select 0, %s4, %s2
  // Predicated region
  $region2: #{_train.2} parent=0 // pred_check
    _
  $region3: #{_train.2} parent=0 // pred_check_branch
    %7 = sbr.rel (0) target = $region5
  $region4: #{_train.2} parent=0 // pred_region
    %s8 = sadd.s32 0, 0
    %s9 = smul.u32 2, %s8
    %p10 = scmp.lt.s32.totalorder %s9, 1
    %s11 = scalar_select %p10, %s9, 1
    %s12 = smul.addr %s11, 8
    %s13 = scalar_lea.vmem %s0, %s12
    %s14 = sadd.s32 0, 0
    %s15 = smul.u32 2, %s14
  $region5: #{_train.2} parent=0 // pred_fallthru
    _
  %s16 = sadd.s32 0, 0
  %s17 = smul.u32 2, %s16
  %p18 = scmp.lt.s32.totalorder %s17, 1
  %s19 = scalar_select %p18, %s17, 1
  %s20 = smul.addr %s19, 8
  %s21 = scalar_lea.vmem %s0, %s20
  %s22 = sadd.s32 0, 0
  %s23 = smul.u32 2, %s22
  %p24 = scmp.lt.s32.totalorder %s23, 1
  %s25 = scalar_select %p24, %s23, 1
  %s26 = smul.addr %s25, 8
  %s27 = scalar_lea.vmem %s0, %s26
  %s28 = sadd.s32 0, 0
  %s29 = smul.u32 2, %s28
  %p30 = scmp.eq.s32.totalorder 0, 0
  // Predicated region
  $region6: #{_train.2} parent=0 // pred_check
    %p31 = pneg %p30
  $region7: #{_train.2} parent=0 // pred_check_branch
    %33 = sbr.rel (%p31) target = $region9
  $region8: #{_train.2} parent=0 // pred_region
    %34 = vst [vmem:[%s1] sm:$0xff] 0.0
    %35 = vst [vmem:[%s1 + $0x8] sm:$0xff] 0.0
    %36 = vst [vmem:[%s1 + $0x10] sm:$0xff] 0.0
    %37 = vst [vmem:[%s1 + $0x18] sm:$0xff] 0.0
    %38 = vst [vmem:[%s1 + $0x20] sm:$0xff] 0.0
    %39 = vst [vmem:[%s1 + $0x28] sm:$0xff] 0.0
    %40 = vst [vmem:[%s1 + $0x30] sm:$0xff] 0.0
    %41 = vst [vmem:[%s1 + $0x38] sm:$0xff] 0.0
    %42 = vst [vmem:[%s1 + $0x40] sm:$0xff] 0.0
    %43 = vst [vmem:[%s1 + $0x48] sm:$0xff] 0.0
    %44 = vst [vmem:[%s1 + $0x50] sm:$0xff] 0.0
    %45 = vst [vmem:[%s1 + $0x58] sm:$0xff] 0.0
    %46 = vst [vmem:[%s1 + $0x60] sm:$0xff] 0.0
    %47 = vst [vmem:[%s1 + $0x68] sm:$0xff] 0.0
    %48 = vst [vmem:[%s1 + $0x70] sm:$0xff] 0.0
    %49 = vst [vmem:[%s1 + $0x78] sm:$0xff] 0.0
  $region9: #{_train.2} parent=0 // pred_fallthru
    _
  %v50 = vld [vmem:[%s27] sm:$0xff]
  %v51 = vld [vmem:[%s27 + $0x8] sm:$0xff]
  %v52 = vld [vmem:[%s1] sm:$0xff]
  %v53 = vld [vmem:[%s1 + $0x8] sm:$0xff]
  %v54 = vld [vmem:[%s1 + $0x10] sm:$0xff]
  %v55 = vld [vmem:[%s1 + $0x18] sm:$0xff]
  %v56 = vld [vmem:[%s1 + $0x20] sm:$0xff]
  %v57 = vld [vmem:[%s1 + $0x28] sm:$0xff]
  %v58 = vld [vmem:[%s1 + $0x30] sm:$0xff]
  %v59 = vld [vmem:[%s1 + $0x38] sm:$0xff]
  %v60 = vld [vmem:[%s1 + $0x40] sm:$0xff]
  %v61 = vld [vmem:[%s1 + $0x48] sm:$0xff]
  %v62 = vld [vmem:[%s1 + $0x50] sm:$0xff]
  %v63 = vld [vmem:[%s1 + $0x58] sm:$0xff]
  %v64 = vld [vmem:[%s1 + $0x60] sm:$0xff]
  %v65 = vld [vmem:[%s1 + $0x68] sm:$0xff]
  %v66 = vld [vmem:[%s1 + $0x70] sm:$0xff]
  %v67 = vld [vmem:[%s1 + $0x78] sm:$0xff]
  %68 = vxpose.xlu0.b32.start [1/16] %v50, 128
  %69 = vxpose.xlu0.b32.cont [2/16] %v51, 128
  %70 = vxpose.xlu0.b32.cont [3/16] 0.0, 128
  %71 = vxpose.xlu0.b32.cont [4/16] 0.0, 128
  %72 = vxpose.xlu0.b32.cont [5/16] 0.0, 128
  %73 = vxpose.xlu0.b32.cont [6/16] 0.0, 128
  %74 = vxpose.xlu0.b32.cont [7/16] 0.0, 128
  %75 = vxpose.xlu0.b32.cont [8/16] 0.0, 128
  %76 = vxpose.xlu0.b32.cont [9/16] 0.0, 128
  %77 = vxpose.xlu0.b32.cont [10/16] 0.0, 128
  %78 = vxpose.xlu0.b32.cont [11/16] 0.0, 128
  %79 = vxpose.xlu0.b32.cont [12/16] 0.0, 128
  %80 = vxpose.xlu0.b32.cont [13/16] 0.0, 128
  %81 = vxpose.xlu0.b32.cont [14/16] 0.0, 128
  %82 = vxpose.xlu0.b32.cont [15/16] 0.0, 128
  %83 = vxpose.xlu0.b32.end [16/16] 0.0, 128
  %v84 = vpop.trf.xlu0
  %v85 = vpop.trf.xlu0
  %v86 = vpop.trf.xlu0
  %v87 = vpop.trf.xlu0
  %v88 = vpop.trf.xlu0
  %v89 = vpop.trf.xlu0
  %v90 = vpop.trf.xlu0
  %v91 = vpop.trf.xlu0
  %v92 = vpop.trf.xlu0
  %v93 = vpop.trf.xlu0
  %v94 = vpop.trf.xlu0
  %v95 = vpop.trf.xlu0
  %v96 = vpop.trf.xlu0
  %v97 = vpop.trf.xlu0
  %v98 = vpop.trf.xlu0
  %v99 = vpop.trf.xlu0
  %vm100 = vcmask 130048
  %v102 = vsel %vm100, %v84, 0
  %v105 = vsel %vm100, %v85, 0
  %v108 = vsel %vm100, %v86, 0
  %v111 = vsel %vm100, %v87, 0
  %v114 = vsel %vm100, %v88, 0
  %v117 = vsel %vm100, %v89, 0
  %v120 = vsel %vm100, %v90, 0
  %v123 = vsel %vm100, %v91, 0
  %v126 = vsel %vm100, %v92, 0
  %v129 = vsel %vm100, %v93, 0
  %v132 = vsel %vm100, %v94, 0
  %v135 = vsel %vm100, %v95, 0
  %v138 = vsel %vm100, %v96, 0
  %v141 = vsel %vm100, %v97, 0
  %v144 = vsel %vm100, %v98, 0
  %v147 = vsel %vm100, %v99, 0
  %149 = vmatprep.subr.mxu0 0.0
  %150 = vmatpush1.msra.mxu0 %v50
  %151 = vmatprep.subr.mxu0 0.0
  %152 = vmatpush1.msra.mxu0 %v51
  %153 = vmatprep.subr.mxu0 0.0
  %154 = vmatpush1.msra.mxu0 0.0
  %155 = vmatprep.subr.mxu0 0.0
  %156 = vmatpush1.msra.mxu0 0.0
  %157 = vmatprep.subr.mxu0 0.0
  %158 = vmatpush1.msra.mxu0 0.0
  %159 = vmatprep.subr.mxu0 0.0
  %160 = vmatpush1.msra.mxu0 0.0
  %161 = vmatprep.subr.mxu0 0.0
  %162 = vmatpush1.msra.mxu0 0.0
  %163 = vmatprep.subr.mxu0 0.0
  %164 = vmatpush1.msra.mxu0 0.0
  %165 = vmatprep.subr.mxu0 0.0
  %166 = vmatpush1.msra.mxu0 0.0
  %167 = vmatprep.subr.mxu0 0.0
  %168 = vmatpush1.msra.mxu0 0.0
  %169 = vmatprep.subr.mxu0 0.0
  %170 = vmatpush1.msra.mxu0 0.0
  %171 = vmatprep.subr.mxu0 0.0
  %172 = vmatpush1.msra.mxu0 0.0
  %173 = vmatprep.subr.mxu0 0.0
  %174 = vmatpush1.msra.mxu0 0.0
  %175 = vmatprep.subr.mxu0 0.0
  %176 = vmatpush1.msra.mxu0 0.0
  %177 = vmatprep.subr.mxu0 0.0
  %178 = vmatpush1.msra.mxu0 0.0
  %179 = vmatprep.subr.mxu0 0.0
  %180 = vmatpush1.msra.mxu0 0.0
  %181 = vmatprep.subr.mxu0 0.0
  %182 = vmatpush1.msra.mxu0 0.0
  %183 = vmatprep.subr.mxu0 0.0
  %184 = vmatpush1.msra.mxu0 0.0
  %185 = vmatprep.subr.mxu0 0.0
  %186 = vmatpush1.msra.mxu0 0.0
  %187 = vmatprep.subr.mxu0 0.0
  %188 = vmatpush1.msra.mxu0 0.0
  %189 = vmatprep.subr.mxu0 0.0
  %190 = vmatpush1.msra.mxu0 0.0
  %191 = vmatprep.subr.mxu0 0.0
  %192 = vmatpush1.msra.mxu0 0.0
  %193 = vmatprep.subr.mxu0 0.0
  %194 = vmatpush1.msra.mxu0 0.0
  %195 = vmatprep.subr.mxu0 0.0
  %196 = vmatpush1.msra.mxu0 0.0
  %197 = vmatprep.subr.mxu0 0.0
  %198 = vmatpush1.msra.mxu0 0.0
  %199 = vmatprep.subr.mxu0 0.0
  %200 = vmatpush1.msra.mxu0 0.0
  %201 = vmatprep.subr.mxu0 0.0
  %202 = vmatpush1.msra.mxu0 0.0
  %203 = vmatprep.subr.mxu0 0.0
  %204 = vmatpush1.msra.mxu0 0.0
  %205 = vmatprep.subr.mxu0 0.0
  %206 = vmatpush1.msra.mxu0 0.0
  %207 = vmatprep.subr.mxu0 0.0
  %208 = vmatpush1.msra.mxu0 0.0
  %209 = vmatprep.subr.mxu0 0.0
  %210 = vmatpush1.msra.mxu0 0.0
  %211 = vmatprep.subr.mxu0 0.0
  %212 = vmatpush1.msra.mxu0 0.0
  %213 = vmatprep.mubr.f32.mxu0 0.0
  %214 = vmatmul.mubr.f32.gmra.mrb[0].mxu0 %v102
  %v215 = vpop.f32.mrb[0].mxu0
  %v216 = vadd.f32 0.0, %v215
  %v217 = vpop.f32.mrb[0].mxu0
  %218 = vmatprep.mubr.f32.mxu0 0.0
  %219 = vmatmul.mubr.f32.gmra.mrb[0].mxu0 %v105
  %v220 = vpop.f32.mrb[0].mxu0
  %v221 = vadd.f32 0.0, %v220
  %v222 = vpop.f32.mrb[0].mxu0
  %223 = vmatprep.mubr.f32.mxu0 0.0
  %224 = vmatmul.mubr.f32.gmra.mrb[0].mxu0 %v108
  %v225 = vpop.f32.mrb[0].mxu0
  %v226 = vadd.f32 0.0, %v225
  %v227 = vpop.f32.mrb[0].mxu0
  %228 = vmatprep.mubr.f32.mxu0 0.0
  %229 = vmatmul.mubr.f32.gmra.mrb[0].mxu0 %v111
  %v230 = vpop.f32.mrb[0].mxu0
  %v231 = vadd.f32 0.0, %v230
  %v232 = vpop.f32.mrb[0].mxu0
  %233 = vmatprep.mubr.f32.mxu0 0.0
  %234 = vmatmul.mubr.f32.gmra.mrb[0].mxu0 %v114
  %v235 = vpop.f32.mrb[0].mxu0
  %v236 = vadd.f32 0.0, %v235
  %v237 = vpop.f32.mrb[0].mxu0
  %238 = vmatprep.mubr.f32.mxu0 0.0
  %239 = vmatmul.mubr.f32.gmra.mrb[0].mxu0 %v117
  %v240 = vpop.f32.mrb[0].mxu0
  %v241 = vadd.f32 0.0, %v240
  %v242 = vpop.f32.mrb[0].mxu0
  %243 = vmatprep.mubr.f32.mxu0 0.0
  %244 = vmatmul.mubr.f32.gmra.mrb[0].mxu0 %v120
  %v245 = vpop.f32.mrb[0].mxu0
  %v246 = vadd.f32 0.0, %v245
  %v247 = vpop.f32.mrb[0].mxu0
  %248 = vmatprep.mubr.f32.mxu0 0.0
  %249 = vmatmul.mubr.f32.gmra.mrb[0].mxu0 %v123
  %v250 = vpop.f32.mrb[0].mxu0
  %v251 = vadd.f32 0.0, %v250
  %v252 = vpop.f32.mrb[0].mxu0
  %253 = vmatprep.mubr.f32.mxu0 0.0
  %254 = vmatmul.mubr.f32.gmra.mrb[0].mxu0 %v126
  %v255 = vpop.f32.mrb[0].mxu0
  %v256 = vadd.f32 0.0, %v255
  %v257 = vpop.f32.mrb[0].mxu0
  %258 = vmatprep.mubr.f32.mxu0 0.0
  %259 = vmatmul.mubr.f32.gmra.mrb[0].mxu0 %v129
  %v260 = vpop.f32.mrb[0].mxu0
  %v261 = vadd.f32 0.0, %v260
  %v262 = vpop.f32.mrb[0].mxu0
  %263 = vmatprep.mubr.f32.mxu0 0.0
  %264 = vmatmul.mubr.f32.gmra.mrb[0].mxu0 %v132
  %v265 = vpop.f32.mrb[0].mxu0
  %v266 = vadd.f32 0.0, %v265
  %v267 = vpop.f32.mrb[0].mxu0
  %268 = vmatprep.mubr.f32.mxu0 0.0
  %269 = vmatmul.mubr.f32.gmra.mrb[0].mxu0 %v135
  %v270 = vpop.f32.mrb[0].mxu0
  %v271 = vadd.f32 0.0, %v270
  %v272 = vpop.f32.mrb[0].mxu0
  %273 = vmatprep.mubr.f32.mxu0 0.0
  %274 = vmatmul.mubr.f32.gmra.mrb[0].mxu0 %v138
  %v275 = vpop.f32.mrb[0].mxu0
  %v276 = vadd.f32 0.0, %v275
  %v277 = vpop.f32.mrb[0].mxu0
  %278 = vmatprep.mubr.f32.mxu0 0.0
  %279 = vmatmul.mubr.f32.gmra.mrb[0].mxu0 %v141
  %v280 = vpop.f32.mrb[0].mxu0
  %v281 = vadd.f32 0.0, %v280
  %v282 = vpop.f32.mrb[0].mxu0
  %283 = vmatprep.mubr.f32.mxu0 0.0
  %284 = vmatmul.mubr.f32.gmra.mrb[0].mxu0 %v144
  %v285 = vpop.f32.mrb[0].mxu0
  %v286 = vadd.f32 0.0, %v285
  %v287 = vpop.f32.mrb[0].mxu0
  %288 = vmatprep.mubr.f32.mxu0 0.0
  %289 = vmatmul.mubr.f32.gmra.mrb[0].mxu0 %v147
  %v290 = vpop.f32.mrb[0].mxu0
  %v291 = vadd.f32 0.0, %v290
  %v292 = vpop.f32.mrb[0].mxu0
  %293 = vdwg.mxu0
  %v294 = vadd.f32 %v52, %v216
  %v295 = vadd.f32 %v53, %v221
  %v296 = vadd.f32 %v54, %v226
  %v297 = vadd.f32 %v55, %v231
  %v298 = vadd.f32 %v56, %v236
  %v299 = vadd.f32 %v57, %v241
  %v300 = vadd.f32 %v58, %v246
  %v301 = vadd.f32 %v59, %v251
  %v302 = vadd.f32 %v60, %v256
  %v303 = vadd.f32 %v61, %v261
  %v304 = vadd.f32 %v62, %v266
  %v305 = vadd.f32 %v63, %v271
  %v306 = vadd.f32 %v64, %v276
  %v307 = vadd.f32 %v65, %v281
  %v308 = vadd.f32 %v66, %v286
  %v309 = vadd.f32 %v67, %v291
  %310 = vst [vmem:[%s1] sm:$0xff] %v294
  %311 = vst [vmem:[%s1 + $0x8] sm:$0xff] %v295
  %312 = vst [vmem:[%s1 + $0x10] sm:$0xff] %v296
  %313 = vst [vmem:[%s1 + $0x18] sm:$0xff] %v297
  %314 = vst [vmem:[%s1 + $0x20] sm:$0xff] %v298
  %315 = vst [vmem:[%s1 + $0x28] sm:$0xff] %v299
  %316 = vst [vmem:[%s1 + $0x30] sm:$0xff] %v300
  %317 = vst [vmem:[%s1 + $0x38] sm:$0xff] %v301
  %318 = vst [vmem:[%s1 + $0x40] sm:$0xff] %v302
  %319 = vst [vmem:[%s1 + $0x48] sm:$0xff] %v303
  %320 = vst [vmem:[%s1 + $0x50] sm:$0xff] %v304
  %321 = vst [vmem:[%s1 + $0x58] sm:$0xff] %v305
  %322 = vst [vmem:[%s1 + $0x60] sm:$0xff] %v306
  %323 = vst [vmem:[%s1 + $0x68] sm:$0xff] %v307
  %324 = vst [vmem:[%s1 + $0x70] sm:$0xff] %v308
  %325 = vst [vmem:[%s1 + $0x78] sm:$0xff] %v309
  %p326 = scmp.eq.s32.totalorder 0, 0
  %p327 = pnand %p30, %p326
  %p328 = pneg %p327
  // Predicated region
  $region10: #{_train.2} parent=0 // pred_check
    _
  $region11: #{_train.2} parent=0 // pred_check_branch
    %330 = sbr.rel (%p327) target = $region13
  $region12: #{_train.2} parent=0 // pred_region
    %v331 = vlaneseq
    %v332 = vshrl.u32 %v331, 7
    %v333 = vadd.s32 %v332, 8
    %v334 = vadd.s32 %v332, 16
    %v335 = vadd.s32 %v332, 24
    %v336 = vadd.s32 %v332, 32
    %v337 = vadd.s32 %v332, 40
    %v338 = vadd.s32 %v332, 48
    %v339 = vadd.s32 %v332, 56
    %v340 = vadd.s32 %v332, 64
    %v341 = vadd.s32 %v332, 72
    %v342 = vadd.s32 %v332, 80
    %v343 = vadd.s32 %v332, 88
    %v344 = vadd.s32 %v332, 96
    %v345 = vadd.s32 %v332, 104
    %v346 = vadd.s32 %v332, 112
    %v347 = vadd.s32 %v332, 120
    %v348 = vlaneseq
    %v349 = vand.u32 %v348, 127
    %vm350 = vcmp.eq.s32.totalorder %v332, %v349
    %vm351 = vcmp.eq.s32.totalorder %v333, %v349
    %vm352 = vcmp.eq.s32.totalorder %v334, %v349
    %vm353 = vcmp.eq.s32.totalorder %v335, %v349
    %vm354 = vcmp.eq.s32.totalorder %v336, %v349
    %vm355 = vcmp.eq.s32.totalorder %v337, %v349
    %vm356 = vcmp.eq.s32.totalorder %v338, %v349
    %vm357 = vcmp.eq.s32.totalorder %v339, %v349
    %vm358 = vcmp.eq.s32.totalorder %v340, %v349
    %vm359 = vcmp.eq.s32.totalorder %v341, %v349
    %vm360 = vcmp.eq.s32.totalorder %v342, %v349
    %vm361 = vcmp.eq.s32.totalorder %v343, %v349
    %vm362 = vcmp.eq.s32.totalorder %v344, %v349
    %vm363 = vcmp.eq.s32.totalorder %v345, %v349
    %vm364 = vcmp.eq.s32.totalorder %v346, %v349
    %vm365 = vcmp.eq.s32.totalorder %v347, %v349
    %vm366 = vcmp.lt.s32.totalorder %v332, 16
    %vm367 = vcmp.lt.s32.totalorder %v333, 16
    %vm368 = vcmp.lt.s32.totalorder %v334, 16
    %vm369 = vcmp.lt.s32.totalorder %v335, 16
    %vm370 = vcmp.lt.s32.totalorder %v336, 16
    %vm371 = vcmp.lt.s32.totalorder %v337, 16
    %vm372 = vcmp.lt.s32.totalorder %v338, 16
    %vm373 = vcmp.lt.s32.totalorder %v339, 16
    %vm374 = vcmp.lt.s32.totalorder %v340, 16
    %vm375 = vcmp.lt.s32.totalorder %v341, 16
    %vm376 = vcmp.lt.s32.totalorder %v342, 16
    %vm377 = vcmp.lt.s32.totalorder %v343, 16
    %vm378 = vcmp.lt.s32.totalorder %v344, 16
    %vm379 = vcmp.lt.s32.totalorder %v345, 16
    %vm380 = vcmp.lt.s32.totalorder %v346, 16
    %vm381 = vcmp.lt.s32.totalorder %v347, 16
    %vm382 = vmand %vm350, %vm366
    %vm383 = vmand %vm351, %vm367
    %vm384 = vmand %vm352, %vm368
    %vm385 = vmand %vm353, %vm369
    %vm386 = vmand %vm354, %vm370
    %vm387 = vmand %vm355, %vm371
    %vm388 = vmand %vm356, %vm372
    %vm389 = vmand %vm357, %vm373
    %vm390 = vmand %vm358, %vm374
    %vm391 = vmand %vm359, %vm375
    %vm392 = vmand %vm360, %vm376
    %vm393 = vmand %vm361, %vm377
    %vm394 = vmand %vm362, %vm378
    %vm395 = vmand %vm363, %vm379
    %vm396 = vmand %vm364, %vm380
    %vm397 = vmand %vm365, %vm381
    %v398 = vld [vmem:[%s1] sm:$0xff]
    %v399 = vld [vmem:[%s1 + $0x8] sm:$0xff]
    %v400 = vld [vmem:[%s1 + $0x10] sm:$0xff]
    %v401 = vld [vmem:[%s1 + $0x18] sm:$0xff]
    %v402 = vld [vmem:[%s1 + $0x20] sm:$0xff]
    %v403 = vld [vmem:[%s1 + $0x28] sm:$0xff]
    %v404 = vld [vmem:[%s1 + $0x30] sm:$0xff]
    %v405 = vld [vmem:[%s1 + $0x38] sm:$0xff]
    %v406 = vld [vmem:[%s1 + $0x40] sm:$0xff]
    %v407 = vld [vmem:[%s1 + $0x48] sm:$0xff]
    %v408 = vld [vmem:[%s1 + $0x50] sm:$0xff]
    %v409 = vld [vmem:[%s1 + $0x58] sm:$0xff]
    %v410 = vld [vmem:[%s1 + $0x60] sm:$0xff]
    %v411 = vld [vmem:[%s1 + $0x68] sm:$0xff]
    %v412 = vld [vmem:[%s1 + $0x70] sm:$0xff]
    %v413 = vld [vmem:[%s1 + $0x78] sm:$0xff]
    %v414 = vsel %vm382, 0.001, 0.0
    %v415 = vsel %vm383, 0.001, 0.0
    %v416 = vsel %vm384, 0.001, 0.0
    %v417 = vsel %vm385, 0.001, 0.0
    %v418 = vsel %vm386, 0.001, 0.0
    %v419 = vsel %vm387, 0.001, 0.0
    %v420 = vsel %vm388, 0.001, 0.0
    %v421 = vsel %vm389, 0.001, 0.0
    %v422 = vsel %vm390, 0.001, 0.0
    %v423 = vsel %vm391, 0.001, 0.0
    %v424 = vsel %vm392, 0.001, 0.0
    %v425 = vsel %vm393, 0.001, 0.0
    %v426 = vsel %vm394, 0.001, 0.0
    %v427 = vsel %vm395, 0.001, 0.0
    %v428 = vsel %vm396, 0.001, 0.0
    %v429 = vsel %vm397, 0.001, 0.0
    %v430 = vadd.f32 %v398, %v414
    %v431 = vadd.f32 %v399, %v415
    %v432 = vadd.f32 %v400, %v416
    %v433 = vadd.f32 %v401, %v417
    %v434 = vadd.f32 %v402, %v418
    %v435 = vadd.f32 %v403, %v419
    %v436 = vadd.f32 %v404, %v420
    %v437 = vadd.f32 %v405, %v421
    %v438 = vadd.f32 %v406, %v422
    %v439 = vadd.f32 %v407, %v423
    %v440 = vadd.f32 %v408, %v424
    %v441 = vadd.f32 %v409, %v425
    %v442 = vadd.f32 %v410, %v426
    %v443 = vadd.f32 %v411, %v427
    %v444 = vadd.f32 %v412, %v428
    %v445 = vadd.f32 %v413, %v429
    %446 = vst [vmem:[%s1] sm:$0xff] %v430
    %447 = vst [vmem:[%s1 + $0x8] sm:$0xff] %v431
    %448 = vst [vmem:[%s1 + $0x10] sm:$0xff] %v432
    %449 = vst [vmem:[%s1 + $0x18] sm:$0xff] %v433
    %450 = vst [vmem:[%s1 + $0x20] sm:$0xff] %v434
    %451 = vst [vmem:[%s1 + $0x28] sm:$0xff] %v435
    %452 = vst [vmem:[%s1 + $0x30] sm:$0xff] %v436
    %453 = vst [vmem:[%s1 + $0x38] sm:$0xff] %v437
    %454 = vst [vmem:[%s1 + $0x40] sm:$0xff] %v438
    %455 = vst [vmem:[%s1 + $0x48] sm:$0xff] %v439
    %456 = vst [vmem:[%s1 + $0x50] sm:$0xff] %v440
    %457 = vst [vmem:[%s1 + $0x58] sm:$0xff] %v441
    %458 = vst [vmem:[%s1 + $0x60] sm:$0xff] %v442
    %459 = vst [vmem:[%s1 + $0x68] sm:$0xff] %v443
    %460 = vst [vmem:[%s1 + $0x70] sm:$0xff] %v444
    %461 = vst [vmem:[%s1 + $0x78] sm:$0xff] %v445
  $region13: #{_train.2} parent=0 // pred_fallthru
    _
  // Predicated region
  $region14: #{_train.2} parent=0 // pred_check
    _
  $region15: #{_train.2} parent=0 // pred_check_branch
    %463 = sbr.rel (0) target = $region17
  $region16: #{_train.2} parent=0 // pred_region
    _
  $region17: #{_train.2} parent=0 // pred_fallthru
    _
  // Predicated region
  $region18: #{_train.2} parent=0 // pred_check
    _
  $region19: #{_train.2} parent=0 // pred_check_branch
    %465 = sbr.rel (0) target = $region21
  $region20: #{_train.2} parent=0 // pred_region
    _
  $region21: #{_train.2} parent=0 // pred_fallthru
    _

// kernel: _train.3
$region0: #{_train.3}
  #allocation0 [shape = 'u32[]', space=smem, size = 0x4, offset = 0x4, fixed_abs, tag = 'smem constant byte address 0x4 - core index']
  #allocation1 [shape = 'u32[144,128]{1,0:T(1,128)}', space=vmem, size = 0x12000, scoped, tag = 'internal scratch']
  %s0 = inlined_call_operand.vmem [shape: f32[16,128], index: 0, kind: input, shape index: {}]
  %s1 = inlined_call_operand.vmem [shape: f32[128,128], index: 1, kind: input, shape index: {}]
  %s2 = inlined_call_operand.vmem [shape: f32[16,128], index: 2, kind: output, shape index: {}]
  %s3 = sld [smem:[#allocation0]]
  $region18: #{_train.3} parent=0
    _
  %s5 = ssub.s32 1, %s3
  %s6 = scalar_select 0, %s5, %s3
  // Predicated region
  $region2: #{_train.3} parent=0 // pred_check
    _
  $region3: #{_train.3} parent=0 // pred_check_branch
    %8 = sbr.rel (0) target = $region5
  $region4: #{_train.3} parent=0 // pred_region
    _
  $region5: #{_train.3} parent=0 // pred_fallthru
    _
  // Predicated region
  $region6: #{_train.3} parent=0 // pred_check
    _
  $region7: #{_train.3} parent=0 // pred_check_branch
    %10 = sbr.rel (0) target = $region9
  $region8: #{_train.3} parent=0 // pred_region
    _
  $region9: #{_train.3} parent=0 // pred_fallthru
    _
  %v11 = vld [vmem:[%s0] sm:$0xff]
  %v12 = vld [vmem:[%s0 + $0x8] sm:$0xff]
  %v13 = vld [vmem:[%s1] sm:$0xff]
  %v14 = vld [vmem:[%s1 + $0x8] sm:$0xff]
  %v15 = vld [vmem:[%s1 + $0x10] sm:$0xff]
  %v16 = vld [vmem:[%s1 + $0x18] sm:$0xff]
  %v17 = vld [vmem:[%s1 + $0x20] sm:$0xff]
  %v18 = vld [vmem:[%s1 + $0x28] sm:$0xff]
  %v19 = vld [vmem:[%s1 + $0x30] sm:$0xff]
  %v20 = vld [vmem:[%s1 + $0x38] sm:$0xff]
  %v21 = vld [vmem:[%s1 + $0x40] sm:$0xff]
  %v22 = vld [vmem:[%s1 + $0x48] sm:$0xff]
  %v23 = vld [vmem:[%s1 + $0x50] sm:$0xff]
  %v24 = vld [vmem:[%s1 + $0x58] sm:$0xff]
  %v25 = vld [vmem:[%s1 + $0x60] sm:$0xff]
  %v26 = vld [vmem:[%s1 + $0x68] sm:$0xff]
  %v27 = vld [vmem:[%s1 + $0x70] sm:$0xff]
  %v28 = vld [vmem:[%s1 + $0x78] sm:$0xff]
  %29 = vmatprep.subr.mxu0 0.0
  %30 = vmatpush1.xpose.msra.mxu0 %v13
  %31 = vmatprep.subr.mxu0 0.0
  %32 = vmatpush1.xpose.msra.mxu0 %v14
  %33 = vmatprep.subr.mxu0 0.0
  %34 = vmatpush1.xpose.msra.mxu0 %v15
  %35 = vmatprep.subr.mxu0 0.0
  %36 = vmatpush1.xpose.msra.mxu0 %v16
  %37 = vmatprep.subr.mxu0 0.0
  %38 = vmatpush1.xpose.msra.mxu0 %v17
  %39 = vmatprep.subr.mxu0 0.0
  %40 = vmatpush1.xpose.msra.mxu0 %v18
  %41 = vmatprep.subr.mxu0 0.0
  %42 = vmatpush1.xpose.msra.mxu0 %v19
  %43 = vmatprep.subr.mxu0 0.0
  %44 = vmatpush1.xpose.msra.mxu0 %v20
  %45 = vmatprep.subr.mxu0 0.0
  %46 = vmatpush1.xpose.msra.mxu0 %v21
  %47 = vmatprep.subr.mxu0 0.0
  %48 = vmatpush1.xpose.msra.mxu0 %v22
  %49 = vmatprep.subr.mxu0 0.0
  %50 = vmatpush1.xpose.msra.mxu0 %v23
  %51 = vmatprep.subr.mxu0 0.0
  %52 = vmatpush1.xpose.msra.mxu0 %v24
  %53 = vmatprep.subr.mxu0 0.0
  %54 = vmatpush1.xpose.msra.mxu0 %v25
  %55 = vmatprep.subr.mxu0 0.0
  %56 = vmatpush1.xpose.msra.mxu0 %v26
  %57 = vmatprep.subr.mxu0 0.0
  %58 = vmatpush1.xpose.msra.mxu0 %v27
  %59 = vmatprep.subr.mxu0 0.0
  %60 = vmatpush1.xpose.msra.mxu0 %v28
  %61 = vmatprep.subr.mxu0 0.0
  %62 = vmatpush1.xpose.msra.mxu0 0.0
  %63 = vmatprep.subr.mxu0 0.0
  %64 = vmatpush1.xpose.msra.mxu0 0.0
  %65 = vmatprep.subr.mxu0 0.0
  %66 = vmatpush1.xpose.msra.mxu0 0.0
  %67 = vmatprep.subr.mxu0 0.0
  %68 = vmatpush1.xpose.msra.mxu0 0.0
  %69 = vmatprep.subr.mxu0 0.0
  %70 = vmatpush1.xpose.msra.mxu0 0.0
  %71 = vmatprep.subr.mxu0 0.0
  %72 = vmatpush1.xpose.msra.mxu0 0.0
  %73 = vmatprep.subr.mxu0 0.0
  %74 = vmatpush1.xpose.msra.mxu0 0.0
  %75 = vmatprep.subr.mxu0 0.0
  %76 = vmatpush1.xpose.msra.mxu0 0.0
  %77 = vmatprep.subr.mxu0 0.0
  %78 = vmatpush1.xpose.msra.mxu0 0.0
  %79 = vmatprep.subr.mxu0 0.0
  %80 = vmatpush1.xpose.msra.mxu0 0.0
  %81 = vmatprep.subr.mxu0 0.0
  %82 = vmatpush1.xpose.msra.mxu0 0.0
  %83 = vmatprep.subr.mxu0 0.0
  %84 = vmatpush1.xpose.msra.mxu0 0.0
  %85 = vmatprep.subr.mxu0 0.0
  %86 = vmatpush1.xpose.msra.mxu0 0.0
  %87 = vmatprep.subr.mxu0 0.0
  %88 = vmatpush1.xpose.msra.mxu0 0.0
  %89 = vmatprep.subr.mxu0 0.0
  %90 = vmatpush1.xpose.msra.mxu0 0.0
  %91 = vmatprep.subr.mxu0 0.0
  %92 = vmatpush1.xpose.msra.mxu0 0.0
  %93 = vmatprep.mubr.f32.mxu0 0.0
  %94 = vmatmul.mubr.f32.gmra.mrb[0].mxu0 %v11
  %v95 = vpop.f32.mrb[0].mxu0
  %v96 = vadd.f32 0.0, %v95
  %v97 = vpop.f32.mrb[0].mxu0
  %98 = vmatprep.mubr.f32.mxu0 0.0
  %99 = vmatmul.mubr.f32.gmra.mrb[0].mxu0 %v12
  %v100 = vpop.f32.mrb[0].mxu0
  %v101 = vadd.f32 0.0, %v100
  %v102 = vpop.f32.mrb[0].mxu0
  %103 = vdwg.mxu0
  %104 = vst [vmem:[%s2] sm:$0xff] %v96
  %105 = vst [vmem:[%s2 + $0x8] sm:$0xff] %v101
  // Predicated region
  $region10: #{_train.3} parent=0 // pred_check
    _
  $region11: #{_train.3} parent=0 // pred_check_branch
    %107 = sbr.rel (0) target = $region13
  $region12: #{_train.3} parent=0 // pred_region
    _
  $region13: #{_train.3} parent=0 // pred_fallthru
    _
  // Predicated region
  $region14: #{_train.3} parent=0 // pred_check
    _
  $region15: #{_train.3} parent=0 // pred_check_branch
    %109 = sbr.rel (0) target = $region17
  $region16: #{_train.3} parent=0 // pred_region
    _
  $region17: #{_train.3} parent=0 // pred_fallthru
    _

</llo_original>
